<compile_context>
chip_gen: v6e
topology: v6e:2x2x1
jax: 0.10.0
libtpu: 0.0.40
codegen_flags: <defaults>
</compile_context>

<pallas_src>
import functools

import jax
import jax.numpy as jnp
from jax.experimental import pallas as pl
from jax.experimental.pallas import tpu as pltpu


def _round_up(n, m):
    return ((n + m - 1) // m) * m


def encoder_kernel(x_ref, y_ref,
                   w1_ref, b1_ref,
                   w2_ref, b2_ref,
                   w3_ref, b3_ref,
                   out_ref, *, z_dim):
    # Masked fill: xc[x == -1] = y[x == -1]   (f32 on the VPU).
    x = x_ref[...]
    y = y_ref[...]
    xc = jnp.where(x == -1.0, y, x)

    # hidden = relu(fc1(xc))   -- bf16 MXU operands, f32 accumulation.
    h1 = jnp.dot(xc.astype(jnp.bfloat16), w1_ref[...],
                 preferred_element_type=jnp.float32) + b1_ref[...]
    h1 = jnp.maximum(h1, 0.0)

    # hidden = relu(fc2(hidden))
    h2 = jnp.dot(h1.astype(jnp.bfloat16), w2_ref[...],
                 preferred_element_type=jnp.float32) + b2_ref[...]
    h2 = jnp.maximum(h2, 0.0)

    # Fused fc31 || fc32 head: one lane-dense (TB, Np) matmul.
    z = jnp.dot(h2.astype(jnp.bfloat16), w3_ref[...],
                preferred_element_type=jnp.float32) + b3_ref[...]

    # Lanes [0, z_dim) -> z_loc ; lanes [z_dim, ...) -> exp() for z_scale
    # (lanes beyond 2*z_dim are padding and get dropped by the wrapper).
    col = jax.lax.broadcasted_iota(jnp.int32, z.shape, 1)
    out_ref[...] = jnp.where(col < z_dim, z, jnp.exp(z))


def encoder_cifar10_forward(x, y, params, *, batch_tile=128):
    """x, y: (B, 3, 32, 32) float32. Returns (z_loc, z_scale): (B, z_dim) each."""
    B = x.shape[0]
    xf = x.reshape(B, 3072)
    yf = y.reshape(B, 3072)

    w1, b1, w2, b2, w31, b31, w32, b32 = params
    z_dim = w31.shape[0]
    hidden_1 = w1.shape[0]
    hidden_2 = w2.shape[0]

    # Batch tiling: a single grid step for small batches, 128-row tiles
    # (streamed, weights resident) for large ones.
    if B <= batch_tile:
        TB = _round_up(B, 8)          # 8-sublane alignment
    else:
        TB = batch_tile
    Bp = _round_up(B, TB)
    if Bp != B:
        xf = jnp.pad(xf, ((0, Bp - B), (0, 0)))
        yf = jnp.pad(yf, ((0, Bp - B), (0, 0)))

    # Fuse the two head projections and pad the fused output dimension to a
    # multiple of 128 lanes so the output store is unmasked / lane-dense.
    Np = _round_up(2 * z_dim, 128)
    w3 = jnp.concatenate([w31, w32], axis=0).T           # (hidden_2, 2*z_dim)
    b3 = jnp.concatenate([b31, b32], axis=0)              # (2*z_dim,)
    if Np != 2 * z_dim:
        w3 = jnp.pad(w3, ((0, 0), (0, Np - 2 * z_dim)))
        b3 = jnp.pad(b3, ((0, Np - 2 * z_dim),))

    # Transpose PyTorch-convention (out, in) weights to (in, out), cast to
    # bf16 for the MXU.  Biases stay f32, shaped (1, out) for broadcast.
    args = (
        xf, yf,
        w1.T.astype(jnp.bfloat16), b1.reshape(1, -1),
        w2.T.astype(jnp.bfloat16), b2.reshape(1, -1),
        w3.astype(jnp.bfloat16), b3.reshape(1, -1),
    )

    grid = (Bp // TB,)
    tile = lambda i: (i, 0)   # batch-tiled operands
    full = lambda i: (0, 0)   # resident weights / biases (DMA'd once)

    in_specs = [
        pl.BlockSpec((TB, 3072), tile),
        pl.BlockSpec((TB, 3072), tile),
        pl.BlockSpec((3072, hidden_1), full),
        pl.BlockSpec((1, hidden_1), full),
        pl.BlockSpec((hidden_1, hidden_2), full),
        pl.BlockSpec((1, hidden_2), full),
        pl.BlockSpec((hidden_2, Np), full),
        pl.BlockSpec((1, Np), full),
    ]
    out_spec = pl.BlockSpec((TB, Np), tile)

    out_bytes = Bp * Np * 4
    in_bytes = sum(int(a.size) * a.dtype.itemsize for a in args)
    flops = 2 * Bp * (3072 * hidden_1 + hidden_1 * hidden_2 + hidden_2 * Np)

    out = pl.pallas_call(
        functools.partial(encoder_kernel, z_dim=z_dim),
        out_shape=jax.ShapeDtypeStruct((Bp, Np), jnp.float32),
        grid=grid,
        in_specs=in_specs,
        out_specs=out_spec,
        compiler_params=pltpu.CompilerParams(
            dimension_semantics=("parallel",)),
        cost_estimate=pl.CostEstimate(
            flops=flops,
            transcendentals=Bp * Np,
            bytes_accessed=in_bytes + out_bytes),
    )(*args)

    z_loc = out[:B, :z_dim]
    z_scale = out[:B, z_dim:2 * z_dim]
    return z_loc, z_scale


def init_params(key, z_dim, hidden_1, hidden_2):
    ks = jax.random.split(key, 8)

    def linear(kw, kb, out_f, in_f):
        bound = 1.0 / jnp.sqrt(in_f)
        w = jax.random.uniform(kw, (out_f, in_f), jnp.float32, -bound, bound)
        b = jax.random.uniform(kb, (out_f,), jnp.float32, -bound, bound)
        return w, b

    w1, b1 = linear(ks[0], ks[1], hidden_1, 3072)
    w2, b2 = linear(ks[2], ks[3], hidden_2, hidden_1)
    w31, b31 = linear(ks[4], ks[5], z_dim, hidden_2)
    w32, b32 = linear(ks[6], ks[7], z_dim, hidden_2)
    return (w1, b1, w2, b2, w31, b31, w32, b32)


def reference_forward_f32(x, y, params):
    """Pure-JAX f32 reference mirroring the PyTorch module semantics."""
    B = x.shape[0]
    xc = jnp.where(x == -1.0, y, x).reshape(B, 3072)
    w1, b1, w2, b2, w31, b31, w32, b32 = params
    h = jnp.maximum(xc @ w1.T + b1, 0.0)
    h = jnp.maximum(h @ w2.T + b2, 0.0)
    return h @ w31.T + b31, jnp.exp(h @ w32.T + b32)


def reference_forward_bf16(x, y, params):
    """Reference using the same bf16-at-dot-inputs recipe as the kernel."""
    B = x.shape[0]
    bf = jnp.bfloat16
    xc = jnp.where(x == -1.0, y, x).reshape(B, 3072)
    w1, b1, w2, b2, w31, b31, w32, b32 = params
    h = jnp.maximum(jnp.dot(xc.astype(bf), w1.T.astype(bf),
                            preferred_element_type=jnp.float32) + b1, 0.0)
    h = jnp.maximum(jnp.dot(h.astype(bf), w2.T.astype(bf),
                            preferred_element_type=jnp.float32) + b2, 0.0)
    w3 = jnp.concatenate([w31, w32], axis=0).T.astype(bf)
    b3 = jnp.concatenate([b31, b32], axis=0)
    z = jnp.dot(h.astype(bf), w3, preferred_element_type=jnp.float32) + b3
    z_dim = w31.shape[0]
    return z[:, :z_dim], jnp.exp(z[:, z_dim:])


def _make_inputs(key, B):
    kx, ky, kmask = jax.random.split(key, 3)
    x = jax.random.uniform(kx, (B, 3, 32, 32), jnp.float32)
    # Plant some -1 "holes" in x that must be filled from y.
    mask = jax.random.bernoulli(kmask, 0.3, (B, 3, 32, 32))
    x = jnp.where(mask, -1.0, x)
    y = jax.random.uniform(ky, (B, 3, 32, 32), jnp.float32)
    return x, y


def _check(x, y, params, z_dim, **kw):
    z_loc, z_scale = encoder_cifar10_forward(x, y, params, **kw)
    jax.block_until_ready((z_loc, z_scale))
    B = x.shape[0]
    assert z_loc.shape == (B, z_dim) and z_scale.shape == (B, z_dim)

    # Tight check vs a reference using the same bf16-weights / f32-acc recipe.
    zl_bf, zs_bf = reference_forward_bf16(x, y, params)
    assert jnp.allclose(z_loc, zl_bf, atol=1e-3, rtol=1e-3)
    assert jnp.allclose(z_scale, zs_bf, atol=1e-3, rtol=1e-3)

    # Loose check vs the exact-f32 PyTorch-equivalent reference
    # (tolerances relaxed because weights are bf16 on the MXU).
    zl_f32, zs_f32 = reference_forward_f32(x, y, params)
    assert jnp.allclose(z_loc, zl_f32, atol=5e-2, rtol=5e-2)
    assert jnp.allclose(z_scale, zs_f32, atol=5e-2, rtol=5e-2)


if __name__ == "__main__":
    key = jax.random.PRNGKey(0)
    k1, k2, kp1, kp2 = jax.random.split(key, 4)

    # Case 1: small batch, lane-aligned head (single grid step).
    B, z_dim, hidden_1, hidden_2 = 2, 64, 256, 128
    params = init_params(kp1, z_dim, hidden_1, hidden_2)
    x, y = _make_inputs(k1, B)
    _check(x, y, params, z_dim)

    # Case 2: multi-step batch grid + padded (non-128) head width.
    B2, z_dim2 = 20, 40
    params2 = init_params(kp2, z_dim2, hidden_1, hidden_2)
    x2, y2 = _make_inputs(k2, B2)
    _check(x2, y2, params2, z_dim2, batch_tile=8)

    print("KERNEL_OK")
</pallas_src>

<mosaic_0001>
module attributes {stable_mosaic.version = 11 : i64} {
  func.func @encoder_kernel(%arg0: i32, %arg1: memref<8x3072xf32, #tpu.memory_space<vmem>>, %arg2: memref<8x3072xf32, #tpu.memory_space<vmem>>, %arg3: memref<3072x256xbf16, #tpu.memory_space<vmem>>, %arg4: memref<1x256xf32, #tpu.memory_space<vmem>>, %arg5: memref<256x128xbf16, #tpu.memory_space<vmem>>, %arg6: memref<1x128xf32, #tpu.memory_space<vmem>>, %arg7: memref<128x128xbf16, #tpu.memory_space<vmem>>, %arg8: memref<1x128xf32, #tpu.memory_space<vmem>>, %arg9: memref<8x128xf32, #tpu.memory_space<vmem>>) attributes {dimension_semantics = [#tpu.dimension_semantics<parallel>], iteration_bounds = array<i64: 1>, scalar_prefetch = 0 : i64, scratch_operands = 0 : i64, tpu.core_type = #tpu.core_type<tc>, window_params = [{transform_indices = @transform_0, window_bounds = array<i64: 8, 3072>}, {transform_indices = @transform_1, window_bounds = array<i64: 8, 3072>}, {pipeline_mode = #tpu.pipeline_mode<synchronous>, transform_indices = @transform_2, window_bounds = array<i64: 3072, 256>}, {pipeline_mode = #tpu.pipeline_mode<synchronous>, transform_indices = @transform_3, window_bounds = array<i64: 1, 256>}, {pipeline_mode = #tpu.pipeline_mode<synchronous>, transform_indices = @transform_4, window_bounds = array<i64: 256, 128>}, {pipeline_mode = #tpu.pipeline_mode<synchronous>, transform_indices = @transform_5, window_bounds = array<i64: 1, 128>}, {pipeline_mode = #tpu.pipeline_mode<synchronous>, transform_indices = @transform_6, window_bounds = array<i64: 128, 128>}, {pipeline_mode = #tpu.pipeline_mode<synchronous>, transform_indices = @transform_7, window_bounds = array<i64: 1, 128>}, {transform_indices = @transform_8, window_bounds = array<i64: 8, 128>}]} {
    %c0 = arith.constant 0 : index
    %c0_0 = arith.constant 0 : index
    %0 = vector.load %arg1[%c0, %c0_0] : memref<8x3072xf32, #tpu.memory_space<vmem>>, vector<8x3072xf32>
    %c0_1 = arith.constant 0 : index
    %c0_2 = arith.constant 0 : index
    %1 = vector.load %arg2[%c0_1, %c0_2] : memref<8x3072xf32, #tpu.memory_space<vmem>>, vector<8x3072xf32>
    %cst = arith.constant -1.000000e+00 : f32
    %2 = vector.broadcast %cst : f32 to vector<8x3072xf32>
    %3 = arith.cmpf oeq, %0, %2 : vector<8x3072xf32>
    %4 = arith.select %3, %1, %0 : vector<8x3072xi1>, vector<8x3072xf32>
    %5 = arith.truncf %4 : vector<8x3072xf32> to vector<8x3072xbf16>
    %c0_3 = arith.constant 0 : index
    %c0_4 = arith.constant 0 : index
    %6 = vector.load %arg3[%c0_3, %c0_4] : memref<3072x256xbf16, #tpu.memory_space<vmem>>, vector<3072x256xbf16>
    %cst_5 = arith.constant dense<0.000000e+00> : vector<8x256xf32>
    %7 = tpu.matmul %5, %6, %cst_5 {dimension_numbers = #tpu.dot_dimension_numbers<[1], [0], [0], [1], [0, 0, 1, 1], [], []>} : vector<8x3072xbf16>, vector<3072x256xbf16>, vector<8x256xf32> -> vector<8x256xf32>
    %c0_6 = arith.constant 0 : index
    %c0_7 = arith.constant 0 : index
    %8 = vector.load %arg4[%c0_6, %c0_7] : memref<1x256xf32, #tpu.memory_space<vmem>>, vector<1x256xf32>
    %9 = vector.broadcast %8 : vector<1x256xf32> to vector<8x256xf32>
    %10 = arith.addf %7, %9 : vector<8x256xf32>
    %cst_8 = arith.constant 0.000000e+00 : f32
    %11 = vector.broadcast %cst_8 : f32 to vector<8x256xf32>
    %12 = arith.maximumf %10, %11 : vector<8x256xf32>
    %13 = arith.truncf %12 : vector<8x256xf32> to vector<8x256xbf16>
    %c0_9 = arith.constant 0 : index
    %c0_10 = arith.constant 0 : index
    %14 = vector.load %arg5[%c0_9, %c0_10] : memref<256x128xbf16, #tpu.memory_space<vmem>>, vector<256x128xbf16>
    %cst_11 = arith.constant dense<0.000000e+00> : vector<8x128xf32>
    %15 = tpu.matmul %13, %14, %cst_11 {dimension_numbers = #tpu.dot_dimension_numbers<[1], [0], [0], [1], [0, 0, 1, 1], [], []>} : vector<8x256xbf16>, vector<256x128xbf16>, vector<8x128xf32> -> vector<8x128xf32>
    %c0_12 = arith.constant 0 : index
    %c0_13 = arith.constant 0 : index
    %16 = vector.load %arg6[%c0_12, %c0_13] : memref<1x128xf32, #tpu.memory_space<vmem>>, vector<1x128xf32>
    %17 = vector.broadcast %16 : vector<1x128xf32> to vector<8x128xf32>
    %18 = arith.addf %15, %17 : vector<8x128xf32>
    %cst_14 = arith.constant 0.000000e+00 : f32
    %19 = vector.broadcast %cst_14 : f32 to vector<8x128xf32>
    %20 = arith.maximumf %18, %19 : vector<8x128xf32>
    %21 = arith.truncf %20 : vector<8x128xf32> to vector<8x128xbf16>
    %c0_15 = arith.constant 0 : index
    %c0_16 = arith.constant 0 : index
    %22 = vector.load %arg7[%c0_15, %c0_16] : memref<128x128xbf16, #tpu.memory_space<vmem>>, vector<128x128xbf16>
    %cst_17 = arith.constant dense<0.000000e+00> : vector<8x128xf32>
    %23 = tpu.matmul %21, %22, %cst_17 {dimension_numbers = #tpu.dot_dimension_numbers<[1], [0], [0], [1], [0, 0, 1, 1], [], []>} : vector<8x128xbf16>, vector<128x128xbf16>, vector<8x128xf32> -> vector<8x128xf32>
    %c0_18 = arith.constant 0 : index
    %c0_19 = arith.constant 0 : index
    %24 = vector.load %arg8[%c0_18, %c0_19] : memref<1x128xf32, #tpu.memory_space<vmem>>, vector<1x128xf32>
    %25 = vector.broadcast %24 : vector<1x128xf32> to vector<8x128xf32>
    %26 = arith.addf %23, %25 : vector<8x128xf32>
    %27 = tpu.iota {dimensions = array<i32: 1>} : vector<8x128xi32>
    %c64_i32 = arith.constant 64 : i32
    %28 = vector.broadcast %c64_i32 : i32 to vector<8x128xi32>
    %29 = arith.cmpi slt, %27, %28 : vector<8x128xi32>
    %30 = math.exp %26 : vector<8x128xf32>
    %31 = arith.select %29, %26, %30 : vector<8x128xi1>, vector<8x128xf32>
    %c0_20 = arith.constant 0 : index
    %c0_21 = arith.constant 0 : index
    %32 = vector.load %arg9[%c0_20, %c0_21] : memref<8x128xf32, #tpu.memory_space<vmem>>, vector<8x128xf32>
    tpu.vector_store %arg9[%c0_20, %c0_21], %31 {strides = array<i32>} : memref<8x128xf32, #tpu.memory_space<vmem>>, vector<8x128xf32>,
    return
  }
  func.func @transform_0(%arg0: i32) -> (i32, i32) {
    %c0_i32 = arith.constant 0 : i32
    %c0_i32_0 = arith.constant 0 : i32
    return %arg0, %c0_i32 : i32, i32
  }
  func.func @transform_1(%arg0: i32) -> (i32, i32) {
    %c0_i32 = arith.constant 0 : i32
    %c0_i32_0 = arith.constant 0 : i32
    return %arg0, %c0_i32 : i32, i32
  }
  func.func @transform_2(%arg0: i32) -> (i32, i32) {
    %c0_i32 = arith.constant 0 : i32
    %c0_i32_0 = arith.constant 0 : i32
    %c0_i32_1 = arith.constant 0 : i32
    return %c0_i32, %c0_i32_0 : i32, i32
  }
  func.func @transform_3(%arg0: i32) -> (i32, i32) {
    %c0_i32 = arith.constant 0 : i32
    %c0_i32_0 = arith.constant 0 : i32
    %c0_i32_1 = arith.constant 0 : i32
    return %c0_i32, %c0_i32_0 : i32, i32
  }
  func.func @transform_4(%arg0: i32) -> (i32, i32) {
    %c0_i32 = arith.constant 0 : i32
    %c0_i32_0 = arith.constant 0 : i32
    %c0_i32_1 = arith.constant 0 : i32
    return %c0_i32, %c0_i32_0 : i32, i32
  }
  func.func @transform_5(%arg0: i32) -> (i32, i32) {
    %c0_i32 = arith.constant 0 : i32
    %c0_i32_0 = arith.constant 0 : i32
    %c0_i32_1 = arith.constant 0 : i32
    return %c0_i32, %c0_i32_0 : i32, i32
  }
  func.func @transform_6(%arg0: i32) -> (i32, i32) {
    %c0_i32 = arith.constant 0 : i32
    %c0_i32_0 = arith.constant 0 : i32
    %c0_i32_1 = arith.constant 0 : i32
    return %c0_i32, %c0_i32_0 : i32, i32
  }
  func.func @transform_7(%arg0: i32) -> (i32, i32) {
    %c0_i32 = arith.constant 0 : i32
    %c0_i32_0 = arith.constant 0 : i32
    %c0_i32_1 = arith.constant 0 : i32
    return %c0_i32, %c0_i32_0 : i32, i32
  }
  func.func @transform_8(%arg0: i32) -> (i32, i32) {
    %c0_i32 = arith.constant 0 : i32
    %c0_i32_0 = arith.constant 0 : i32
    return %arg0, %c0_i32 : i32, i32
  }
}

</mosaic_0001>

<llo_original>
// kernel: tpu_custom_call.1
$region0: #{tpu_custom_call.1}
  #allocation0 [shape = 'u32[]', space=smem, size = 0x4, offset = 0x4, fixed_abs, tag = 'smem constant byte address 0x4 - core index']
  #allocation1 [shape = 'u32[144,128]{1,0:T(1,128)}', space=vmem, size = 0x12000, scoped, tag = 'internal scratch']
  %s0 = inlined_call_operand.hbm [shape: f32[8,3072], index: 0, kind: input, shape index: {}]
  %s1 = inlined_call_operand.hbm [shape: f32[8,3072], index: 1, kind: input, shape index: {}]
  %s2 = inlined_call_operand.hbm [shape: bf16[3072,256], index: 2, kind: input, shape index: {}]
  %s3 = inlined_call_operand.hbm [shape: f32[1,256], index: 3, kind: input, shape index: {}]
  %s4 = inlined_call_operand.hbm [shape: bf16[256,128], index: 4, kind: input, shape index: {}]
  %s5 = inlined_call_operand.hbm [shape: f32[1,128], index: 5, kind: input, shape index: {}]
  %s6 = inlined_call_operand.hbm [shape: bf16[128,128], index: 6, kind: input, shape index: {}]
  %s7 = inlined_call_operand.hbm [shape: f32[1,128], index: 7, kind: input, shape index: {}]
  %s8 = inlined_call_operand.hbm [shape: f32[8,128], index: 8, kind: output, shape index: {}]
  %s9 = sld [smem:[#allocation0]]
  $region74: #{tpu_custom_call.1} parent=0
    _
  %s11 = ssub.s32 1, %s9
  %s12 = scalar_select 0, %s11, %s9
  $region1: #{tpu_custom_call.1} parent=0
    #allocation2 [shape = 'u8[98304]{0}', space=vmem, size = 0x18000, scoped, tag = 'input window, operand 0, single buffered']
    #allocation3 [shape = 's32[1]{0}', space=sflag, size = 0x4, scoped, tag = 'scoped memory for tpu_custom_call.1']
    #allocation4 [shape = 's32[1]{0}', space=sflag, size = 0x4, scoped, tag = 'scoped memory for tpu_custom_call.1']
    #allocation5 [shape = 'u8[98304]{0}', space=vmem, size = 0x18000, scoped, tag = 'input window, operand 1, single buffered']
    #allocation6 [shape = 's32[1]{0}', space=sflag, size = 0x4, scoped, tag = 'scoped memory for tpu_custom_call.1']
    #allocation7 [shape = 'u8[1572864]{0}', space=vmem, size = 0x180000, scoped, tag = 'input window, operand 2, single buffered']
    #allocation8 [shape = 'u8[1024]{0}', space=vmem, size = 0x400, scoped, tag = 'input window, operand 3, single buffered']
    #allocation9 [shape = 's32[1]{0}', space=sflag, size = 0x4, scoped, tag = 'scoped memory for tpu_custom_call.1']
    #allocation10 [shape = 'u8[65536]{0}', space=vmem, size = 0x10000, scoped, tag = 'input window, operand 4, single buffered']
    #allocation11 [shape = 'u8[512]{0}', space=vmem, size = 0x400, scoped, tag = 'input window, operand 5, single buffered']
    #allocation12 [shape = 's32[1]{0}', space=sflag, size = 0x4, scoped, tag = 'scoped memory for tpu_custom_call.1']
    #allocation13 [shape = 'u8[32768]{0}', space=vmem, size = 0x8000, scoped, tag = 'input window, operand 6, single buffered']
    #allocation14 [shape = 'u8[512]{0}', space=vmem, size = 0x400, scoped, tag = 'input window, operand 7, single buffered']
    #allocation15 [shape = 's32[1]{0}', space=sflag, size = 0x4, scoped, tag = 'scoped memory for tpu_custom_call.1']
    #allocation16 [shape = 'u8[4096]{0}', space=vmem, size = 0x1000, scoped, tag = 'output window, operand 0, single buffered']
    %13 = vsyncpa [#allocation3], 0
    %14 = vsyncpa [#allocation6], 0
    %15 = vsyncpa [#allocation9], 0
    %16 = vsyncpa [#allocation12], 0
    %17 = vsyncpa [#allocation15], 0
    %18 = vsyncpa [#allocation4], 0
    // Predicated region
    $region2: #{tpu_custom_call.1} parent=1 // pred_check
      _
    $region3: #{tpu_custom_call.1} parent=1 // pred_check_branch
      %20 = sbr.rel (0) target = $region5
    $region4: #{tpu_custom_call.1} parent=1 // pred_region
      %s22 = ssub.s32 3072, 3072
      %23 = vsyncadd [#allocation3], %s22
      %s25 = sshll.u32 [#allocation2], 4
      %s26 = int_to_ptr.vmem [resolvable:$true] %s25
      %28 = dma.hbm_to_vmem [thread:$0]  %s0, 3072, %s26, [#allocation3]
    $region5: #{tpu_custom_call.1} parent=1 // pred_fallthru
      _
    // Predicated region
    $region6: #{tpu_custom_call.1} parent=1 // pred_check
      _
    $region7: #{tpu_custom_call.1} parent=1 // pred_check_branch
      %30 = sbr.rel (0) target = $region9
    $region8: #{tpu_custom_call.1} parent=1 // pred_region
      %s32 = ssub.s32 3072, 3072
      %33 = vsyncadd [#allocation6], %s32
      %s35 = sshll.u32 [#allocation5], 4
      %s36 = int_to_ptr.vmem [resolvable:$true] %s35
      %38 = dma.hbm_to_vmem [thread:$0]  %s1, 3072, %s36, [#allocation6]
    $region9: #{tpu_custom_call.1} parent=1 // pred_fallthru
      _
    // Predicated region
    $region10: #{tpu_custom_call.1} parent=1 // pred_check
      _
    $region11: #{tpu_custom_call.1} parent=1 // pred_check_branch
      %40 = sbr.rel (0) target = $region13
    $region12: #{tpu_custom_call.1} parent=1 // pred_region
      %s42 = ssub.s32 49152, 49152
      %43 = vsyncadd [#allocation6], %s42
      %s44 = sshll.u32 [#allocation7], 4
      %s45 = int_to_ptr.vmem [resolvable:$true] %s44
      %50 = dma.hbm_to_vmem [thread:$0]  %s2, 49152, %s45, [#allocation6], 128, 128, 8
    $region13: #{tpu_custom_call.1} parent=1 // pred_fallthru
      _
    // Predicated region
    $region14: #{tpu_custom_call.1} parent=1 // pred_check
      _
    $region15: #{tpu_custom_call.1} parent=1 // pred_check_branch
      %52 = sbr.rel (0) target = $region17
    $region16: #{tpu_custom_call.1} parent=1 // pred_region
      %s54 = ssub.s32 32, 32
      %55 = vsyncadd [#allocation9], %s54
      %s57 = sshll.u32 [#allocation8], 4
      %s58 = int_to_ptr.vmem [resolvable:$true] %s57
      %60 = dma.hbm_to_vmem [thread:$0]  %s3, 32, %s58, [#allocation9]
    $region17: #{tpu_custom_call.1} parent=1 // pred_fallthru
      _
    // Predicated region
    $region18: #{tpu_custom_call.1} parent=1 // pred_check
      _
    $region19: #{tpu_custom_call.1} parent=1 // pred_check_branch
      %62 = sbr.rel (0) target = $region21
    $region20: #{tpu_custom_call.1} parent=1 // pred_region
      %s64 = ssub.s32 2048, 2048
      %65 = vsyncadd [#allocation9], %s64
      %s66 = sshll.u32 [#allocation10], 4
      %s67 = int_to_ptr.vmem [resolvable:$true] %s66
      %72 = dma.hbm_to_vmem [thread:$0]  %s4, 2048, %s67, [#allocation9], 64, 64, 4
    $region21: #{tpu_custom_call.1} parent=1 // pred_fallthru
      _
    // Predicated region
    $region22: #{tpu_custom_call.1} parent=1 // pred_check
      _
    $region23: #{tpu_custom_call.1} parent=1 // pred_check_branch
      %74 = sbr.rel (0) target = $region25
    $region24: #{tpu_custom_call.1} parent=1 // pred_region
      %s76 = ssub.s32 16, 16
      %77 = vsyncadd [#allocation12], %s76
      %s79 = sshll.u32 [#allocation11], 4
      %s80 = int_to_ptr.vmem [resolvable:$true] %s79
      %82 = dma.hbm_to_vmem [thread:$0]  %s5, 16, %s80, [#allocation12]
    $region25: #{tpu_custom_call.1} parent=1 // pred_fallthru
      _
    // Predicated region
    $region26: #{tpu_custom_call.1} parent=1 // pred_check
      _
    $region27: #{tpu_custom_call.1} parent=1 // pred_check_branch
      %84 = sbr.rel (0) target = $region29
    $region28: #{tpu_custom_call.1} parent=1 // pred_region
      %s86 = ssub.s32 1024, 1024
      %87 = vsyncadd [#allocation12], %s86
      %s88 = sshll.u32 [#allocation13], 4
      %s89 = int_to_ptr.vmem [resolvable:$true] %s88
      %94 = dma.hbm_to_vmem [thread:$0]  %s6, 1024, %s89, [#allocation12], 64, 64, 4
    $region29: #{tpu_custom_call.1} parent=1 // pred_fallthru
      _
    // Predicated region
    $region30: #{tpu_custom_call.1} parent=1 // pred_check
      _
    $region31: #{tpu_custom_call.1} parent=1 // pred_check_branch
      %96 = sbr.rel (0) target = $region33
    $region32: #{tpu_custom_call.1} parent=1 // pred_region
      %s98 = ssub.s32 16, 16
      %99 = vsyncadd [#allocation15], %s98
      %s101 = sshll.u32 [#allocation14], 4
      %s102 = int_to_ptr.vmem [resolvable:$true] %s101
      %104 = dma.hbm_to_vmem [thread:$0]  %s7, 16, %s102, [#allocation15]
    $region33: #{tpu_custom_call.1} parent=1 // pred_fallthru
      _
    // Predicated region
    $region34: #{tpu_custom_call.1} parent=1 // pred_check
      _
    $region35: #{tpu_custom_call.1} parent=1 // pred_check_branch
      %106 = sbr.rel (0) target = $region37
    $region36: #{tpu_custom_call.1} parent=1 // pred_region
      %107 = dma.done [#allocation3], 3072
    $region37: #{tpu_custom_call.1} parent=1 // pred_fallthru
      _
    // Predicated region
    $region38: #{tpu_custom_call.1} parent=1 // pred_check
      _
    $region39: #{tpu_custom_call.1} parent=1 // pred_check_branch
      %109 = sbr.rel (0) target = $region41
    $region40: #{tpu_custom_call.1} parent=1 // pred_region
      %110 = dma.done [#allocation6], 3072
    $region41: #{tpu_custom_call.1} parent=1 // pred_fallthru
      _
    // Predicated region
    $region42: #{tpu_custom_call.1} parent=1 // pred_check
      _
    $region43: #{tpu_custom_call.1} parent=1 // pred_check_branch
      %112 = sbr.rel (0) target = $region45
    $region44: #{tpu_custom_call.1} parent=1 // pred_region
      %113 = dma.done [#allocation6], 49152
    $region45: #{tpu_custom_call.1} parent=1 // pred_fallthru
      _
    // Predicated region
    $region46: #{tpu_custom_call.1} parent=1 // pred_check
      _
    $region47: #{tpu_custom_call.1} parent=1 // pred_check_branch
      %115 = sbr.rel (0) target = $region49
    $region48: #{tpu_custom_call.1} parent=1 // pred_region
      %116 = dma.done [#allocation9], 32
    $region49: #{tpu_custom_call.1} parent=1 // pred_fallthru
      _
    // Predicated region
    $region50: #{tpu_custom_call.1} parent=1 // pred_check
      _
    $region51: #{tpu_custom_call.1} parent=1 // pred_check_branch
      %118 = sbr.rel (0) target = $region53
    $region52: #{tpu_custom_call.1} parent=1 // pred_region
      %119 = dma.done [#allocation9], 2048
    $region53: #{tpu_custom_call.1} parent=1 // pred_fallthru
      _
    // Predicated region
    $region54: #{tpu_custom_call.1} parent=1 // pred_check
      _
    $region55: #{tpu_custom_call.1} parent=1 // pred_check_branch
      %121 = sbr.rel (0) target = $region57
    $region56: #{tpu_custom_call.1} parent=1 // pred_region
      %122 = dma.done [#allocation12], 16
    $region57: #{tpu_custom_call.1} parent=1 // pred_fallthru
      _
    // Predicated region
    $region58: #{tpu_custom_call.1} parent=1 // pred_check
      _
    $region59: #{tpu_custom_call.1} parent=1 // pred_check_branch
      %124 = sbr.rel (0) target = $region61
    $region60: #{tpu_custom_call.1} parent=1 // pred_region
      %125 = dma.done [#allocation12], 1024
    $region61: #{tpu_custom_call.1} parent=1 // pred_fallthru
      _
    // Predicated region
    $region62: #{tpu_custom_call.1} parent=1 // pred_check
      _
    $region63: #{tpu_custom_call.1} parent=1 // pred_check_branch
      %127 = sbr.rel (0) target = $region65
    $region64: #{tpu_custom_call.1} parent=1 // pred_region
      %128 = dma.done [#allocation15], 16
    $region65: #{tpu_custom_call.1} parent=1 // pred_fallthru
      _
    %v130 = vld [vmem:[#allocation2] sm:$0xff]
    %v131 = vld [vmem:[#allocation2 + $0x8] sm:$0xff]
    %v132 = vld [vmem:[#allocation2 + $0x10] sm:$0xff]
    %v133 = vld [vmem:[#allocation2 + $0x18] sm:$0xff]
    %v134 = vld [vmem:[#allocation2 + $0x20] sm:$0xff]
    %v135 = vld [vmem:[#allocation2 + $0x28] sm:$0xff]
    %v136 = vld [vmem:[#allocation2 + $0x30] sm:$0xff]
    %v137 = vld [vmem:[#allocation2 + $0x38] sm:$0xff]
    %v138 = vld [vmem:[#allocation2 + $0x40] sm:$0xff]
    %v139 = vld [vmem:[#allocation2 + $0x48] sm:$0xff]
    %v140 = vld [vmem:[#allocation2 + $0x50] sm:$0xff]
    %v141 = vld [vmem:[#allocation2 + $0x58] sm:$0xff]
    %v142 = vld [vmem:[#allocation2 + $0x60] sm:$0xff]
    %v143 = vld [vmem:[#allocation2 + $0x68] sm:$0xff]
    %v144 = vld [vmem:[#allocation2 + $0x70] sm:$0xff]
    %v145 = vld [vmem:[#allocation2 + $0x78] sm:$0xff]
    %v146 = vld [vmem:[#allocation2 + $0x80] sm:$0xff]
    %v147 = vld [vmem:[#allocation2 + $0x88] sm:$0xff]
    %v148 = vld [vmem:[#allocation2 + $0x90] sm:$0xff]
    %v149 = vld [vmem:[#allocation2 + $0x98] sm:$0xff]
    %v150 = vld [vmem:[#allocation2 + $0xa0] sm:$0xff]
    %v151 = vld [vmem:[#allocation2 + $0xa8] sm:$0xff]
    %v152 = vld [vmem:[#allocation2 + $0xb0] sm:$0xff]
    %v153 = vld [vmem:[#allocation2 + $0xb8] sm:$0xff]
    %v154 = vld [vmem:[#allocation5] sm:$0xff]
    %v155 = vld [vmem:[#allocation5 + $0x8] sm:$0xff]
    %v156 = vld [vmem:[#allocation5 + $0x10] sm:$0xff]
    %v157 = vld [vmem:[#allocation5 + $0x18] sm:$0xff]
    %v158 = vld [vmem:[#allocation5 + $0x20] sm:$0xff]
    %v159 = vld [vmem:[#allocation5 + $0x28] sm:$0xff]
    %v160 = vld [vmem:[#allocation5 + $0x30] sm:$0xff]
    %v161 = vld [vmem:[#allocation5 + $0x38] sm:$0xff]
    %v162 = vld [vmem:[#allocation5 + $0x40] sm:$0xff]
    %v163 = vld [vmem:[#allocation5 + $0x48] sm:$0xff]
    %v164 = vld [vmem:[#allocation5 + $0x50] sm:$0xff]
    %v165 = vld [vmem:[#allocation5 + $0x58] sm:$0xff]
    %v166 = vld [vmem:[#allocation5 + $0x60] sm:$0xff]
    %v167 = vld [vmem:[#allocation5 + $0x68] sm:$0xff]
    %v168 = vld [vmem:[#allocation5 + $0x70] sm:$0xff]
    %v169 = vld [vmem:[#allocation5 + $0x78] sm:$0xff]
    %v170 = vld [vmem:[#allocation5 + $0x80] sm:$0xff]
    %v171 = vld [vmem:[#allocation5 + $0x88] sm:$0xff]
    %v172 = vld [vmem:[#allocation5 + $0x90] sm:$0xff]
    %v173 = vld [vmem:[#allocation5 + $0x98] sm:$0xff]
    %v174 = vld [vmem:[#allocation5 + $0xa0] sm:$0xff]
    %v175 = vld [vmem:[#allocation5 + $0xa8] sm:$0xff]
    %v176 = vld [vmem:[#allocation5 + $0xb0] sm:$0xff]
    %v177 = vld [vmem:[#allocation5 + $0xb8] sm:$0xff]
    %vm178 = vcmp.eq.f32.partialorder %v130, -1.0
    %vm179 = vcmp.eq.f32.partialorder %v131, -1.0
    %vm180 = vcmp.eq.f32.partialorder %v132, -1.0
    %vm181 = vcmp.eq.f32.partialorder %v133, -1.0
    %vm182 = vcmp.eq.f32.partialorder %v134, -1.0
    %vm183 = vcmp.eq.f32.partialorder %v135, -1.0
    %vm184 = vcmp.eq.f32.partialorder %v136, -1.0
    %vm185 = vcmp.eq.f32.partialorder %v137, -1.0
    %vm186 = vcmp.eq.f32.partialorder %v138, -1.0
    %vm187 = vcmp.eq.f32.partialorder %v139, -1.0
    %vm188 = vcmp.eq.f32.partialorder %v140, -1.0
    %vm189 = vcmp.eq.f32.partialorder %v141, -1.0
    %vm190 = vcmp.eq.f32.partialorder %v142, -1.0
    %vm191 = vcmp.eq.f32.partialorder %v143, -1.0
    %vm192 = vcmp.eq.f32.partialorder %v144, -1.0
    %vm193 = vcmp.eq.f32.partialorder %v145, -1.0
    %vm194 = vcmp.eq.f32.partialorder %v146, -1.0
    %vm195 = vcmp.eq.f32.partialorder %v147, -1.0
    %vm196 = vcmp.eq.f32.partialorder %v148, -1.0
    %vm197 = vcmp.eq.f32.partialorder %v149, -1.0
    %vm198 = vcmp.eq.f32.partialorder %v150, -1.0
    %vm199 = vcmp.eq.f32.partialorder %v151, -1.0
    %vm200 = vcmp.eq.f32.partialorder %v152, -1.0
    %vm201 = vcmp.eq.f32.partialorder %v153, -1.0
    %v202 = vsel %vm178, %v154, %v130
    %v203 = vsel %vm179, %v155, %v131
    %v204 = vsel %vm180, %v156, %v132
    %v205 = vsel %vm181, %v157, %v133
    %v206 = vsel %vm182, %v158, %v134
    %v207 = vsel %vm183, %v159, %v135
    %v208 = vsel %vm184, %v160, %v136
    %v209 = vsel %vm185, %v161, %v137
    %v210 = vsel %vm186, %v162, %v138
    %v211 = vsel %vm187, %v163, %v139
    %v212 = vsel %vm188, %v164, %v140
    %v213 = vsel %vm189, %v165, %v141
    %v214 = vsel %vm190, %v166, %v142
    %v215 = vsel %vm191, %v167, %v143
    %v216 = vsel %vm192, %v168, %v144
    %v217 = vsel %vm193, %v169, %v145
    %v218 = vsel %vm194, %v170, %v146
    %v219 = vsel %vm195, %v171, %v147
    %v220 = vsel %vm196, %v172, %v148
    %v221 = vsel %vm197, %v173, %v149
    %v222 = vsel %vm198, %v174, %v150
    %v223 = vsel %vm199, %v175, %v151
    %v224 = vsel %vm200, %v176, %v152
    %v225 = vsel %vm201, %v177, %v153
    %v226 = vpack.c.bf16 %v202, %v202
    %v227 = vpack.c.bf16 %v203, %v203
    %v228 = vpack.c.bf16 %v204, %v204
    %v229 = vpack.c.bf16 %v205, %v205
    %v230 = vpack.c.bf16 %v206, %v206
    %v231 = vpack.c.bf16 %v207, %v207
    %v232 = vpack.c.bf16 %v208, %v208
    %v233 = vpack.c.bf16 %v209, %v209
    %v234 = vpack.c.bf16 %v210, %v210
    %v235 = vpack.c.bf16 %v211, %v211
    %v236 = vpack.c.bf16 %v212, %v212
    %v237 = vpack.c.bf16 %v213, %v213
    %v238 = vpack.c.bf16 %v214, %v214
    %v239 = vpack.c.bf16 %v215, %v215
    %v240 = vpack.c.bf16 %v216, %v216
    %v241 = vpack.c.bf16 %v217, %v217
    %v242 = vpack.c.bf16 %v218, %v218
    %v243 = vpack.c.bf16 %v219, %v219
    %v244 = vpack.c.bf16 %v220, %v220
    %v245 = vpack.c.bf16 %v221, %v221
    %v246 = vpack.c.bf16 %v222, %v222
    %v247 = vpack.c.bf16 %v223, %v223
    %v248 = vpack.c.bf16 %v224, %v224
    %v249 = vpack.c.bf16 %v225, %v225
    %v250 = vld [vmem:[#allocation7] sm:$0xff]
    %v251 = vld [vmem:[#allocation7 + $0x8] sm:$0xff]
    %v252 = vld [vmem:[#allocation7 + $0x10] sm:$0xff]
    %v253 = vld [vmem:[#allocation7 + $0x18] sm:$0xff]
    %v254 = vld [vmem:[#allocation7 + $0x20] sm:$0xff]
    %v255 = vld [vmem:[#allocation7 + $0x28] sm:$0xff]
    %v256 = vld [vmem:[#allocation7 + $0x30] sm:$0xff]
    %v257 = vld [vmem:[#allocation7 + $0x38] sm:$0xff]
    %v258 = vld [vmem:[#allocation7 + $0x40] sm:$0xff]
    %v259 = vld [vmem:[#allocation7 + $0x48] sm:$0xff]
    %v260 = vld [vmem:[#allocation7 + $0x50] sm:$0xff]
    %v261 = vld [vmem:[#allocation7 + $0x58] sm:$0xff]
    %v262 = vld [vmem:[#allocation7 + $0x60] sm:$0xff]
    %v263 = vld [vmem:[#allocation7 + $0x68] sm:$0xff]
    %v264 = vld [vmem:[#allocation7 + $0x70] sm:$0xff]
    %v265 = vld [vmem:[#allocation7 + $0x78] sm:$0xff]
    %v266 = vld [vmem:[#allocation7 + $0x80] sm:$0xff]
    %v267 = vld [vmem:[#allocation7 + $0x88] sm:$0xff]
    %v268 = vld [vmem:[#allocation7 + $0x90] sm:$0xff]
    %v269 = vld [vmem:[#allocation7 + $0x98] sm:$0xff]
    %v270 = vld [vmem:[#allocation7 + $0xa0] sm:$0xff]
    %v271 = vld [vmem:[#allocation7 + $0xa8] sm:$0xff]
    %v272 = vld [vmem:[#allocation7 + $0xb0] sm:$0xff]
    %v273 = vld [vmem:[#allocation7 + $0xb8] sm:$0xff]
    %v274 = vld [vmem:[#allocation7 + $0xc0] sm:$0xff]
    %v275 = vld [vmem:[#allocation7 + $0xc8] sm:$0xff]
    %v276 = vld [vmem:[#allocation7 + $0xd0] sm:$0xff]
    %v277 = vld [vmem:[#allocation7 + $0xd8] sm:$0xff]
    %v278 = vld [vmem:[#allocation7 + $0xe0] sm:$0xff]
    %v279 = vld [vmem:[#allocation7 + $0xe8] sm:$0xff]
    %v280 = vld [vmem:[#allocation7 + $0xf0] sm:$0xff]
    %v281 = vld [vmem:[#allocation7 + $0xf8] sm:$0xff]
    %v282 = vld [vmem:[#allocation7 + $0x100] sm:$0xff]
    %v283 = vld [vmem:[#allocation7 + $0x108] sm:$0xff]
    %v284 = vld [vmem:[#allocation7 + $0x110] sm:$0xff]
    %v285 = vld [vmem:[#allocation7 + $0x118] sm:$0xff]
    %v286 = vld [vmem:[#allocation7 + $0x120] sm:$0xff]
    %v287 = vld [vmem:[#allocation7 + $0x128] sm:$0xff]
    %v288 = vld [vmem:[#allocation7 + $0x130] sm:$0xff]
    %v289 = vld [vmem:[#allocation7 + $0x138] sm:$0xff]
    %v290 = vld [vmem:[#allocation7 + $0x140] sm:$0xff]
    %v291 = vld [vmem:[#allocation7 + $0x148] sm:$0xff]
    %v292 = vld [vmem:[#allocation7 + $0x150] sm:$0xff]
    %v293 = vld [vmem:[#allocation7 + $0x158] sm:$0xff]
    %v294 = vld [vmem:[#allocation7 + $0x160] sm:$0xff]
    %v295 = vld [vmem:[#allocation7 + $0x168] sm:$0xff]
    %v296 = vld [vmem:[#allocation7 + $0x170] sm:$0xff]
    %v297 = vld [vmem:[#allocation7 + $0x178] sm:$0xff]
    %v298 = vld [vmem:[#allocation7 + $0x180] sm:$0xff]
    %v299 = vld [vmem:[#allocation7 + $0x188] sm:$0xff]
    %v300 = vld [vmem:[#allocation7 + $0x190] sm:$0xff]
    %v301 = vld [vmem:[#allocation7 + $0x198] sm:$0xff]
    %v302 = vld [vmem:[#allocation7 + $0x1a0] sm:$0xff]
    %v303 = vld [vmem:[#allocation7 + $0x1a8] sm:$0xff]
    %v304 = vld [vmem:[#allocation7 + $0x1b0] sm:$0xff]
    %v305 = vld [vmem:[#allocation7 + $0x1b8] sm:$0xff]
    %v306 = vld [vmem:[#allocation7 + $0x1c0] sm:$0xff]
    %v307 = vld [vmem:[#allocation7 + $0x1c8] sm:$0xff]
    %v308 = vld [vmem:[#allocation7 + $0x1d0] sm:$0xff]
    %v309 = vld [vmem:[#allocation7 + $0x1d8] sm:$0xff]
    %v310 = vld [vmem:[#allocation7 + $0x1e0] sm:$0xff]
    %v311 = vld [vmem:[#allocation7 + $0x1e8] sm:$0xff]
    %v312 = vld [vmem:[#allocation7 + $0x1f0] sm:$0xff]
    %v313 = vld [vmem:[#allocation7 + $0x1f8] sm:$0xff]
    %v314 = vld [vmem:[#allocation7 + $0x200] sm:$0xff]
    %v315 = vld [vmem:[#allocation7 + $0x208] sm:$0xff]
    %v316 = vld [vmem:[#allocation7 + $0x210] sm:$0xff]
    %v317 = vld [vmem:[#allocation7 + $0x218] sm:$0xff]
    %v318 = vld [vmem:[#allocation7 + $0x220] sm:$0xff]
    %v319 = vld [vmem:[#allocation7 + $0x228] sm:$0xff]
    %v320 = vld [vmem:[#allocation7 + $0x230] sm:$0xff]
    %v321 = vld [vmem:[#allocation7 + $0x238] sm:$0xff]
    %v322 = vld [vmem:[#allocation7 + $0x240] sm:$0xff]
    %v323 = vld [vmem:[#allocation7 + $0x248] sm:$0xff]
    %v324 = vld [vmem:[#allocation7 + $0x250] sm:$0xff]
    %v325 = vld [vmem:[#allocation7 + $0x258] sm:$0xff]
    %v326 = vld [vmem:[#allocation7 + $0x260] sm:$0xff]
    %v327 = vld [vmem:[#allocation7 + $0x268] sm:$0xff]
    %v328 = vld [vmem:[#allocation7 + $0x270] sm:$0xff]
    %v329 = vld [vmem:[#allocation7 + $0x278] sm:$0xff]
    %v330 = vld [vmem:[#allocation7 + $0x280] sm:$0xff]
    %v331 = vld [vmem:[#allocation7 + $0x288] sm:$0xff]
    %v332 = vld [vmem:[#allocation7 + $0x290] sm:$0xff]
    %v333 = vld [vmem:[#allocation7 + $0x298] sm:$0xff]
    %v334 = vld [vmem:[#allocation7 + $0x2a0] sm:$0xff]
    %v335 = vld [vmem:[#allocation7 + $0x2a8] sm:$0xff]
    %v336 = vld [vmem:[#allocation7 + $0x2b0] sm:$0xff]
    %v337 = vld [vmem:[#allocation7 + $0x2b8] sm:$0xff]
    %v338 = vld [vmem:[#allocation7 + $0x2c0] sm:$0xff]
    %v339 = vld [vmem:[#allocation7 + $0x2c8] sm:$0xff]
    %v340 = vld [vmem:[#allocation7 + $0x2d0] sm:$0xff]
    %v341 = vld [vmem:[#allocation7 + $0x2d8] sm:$0xff]
    %v342 = vld [vmem:[#allocation7 + $0x2e0] sm:$0xff]
    %v343 = vld [vmem:[#allocation7 + $0x2e8] sm:$0xff]
    %v344 = vld [vmem:[#allocation7 + $0x2f0] sm:$0xff]
    %v345 = vld [vmem:[#allocation7 + $0x2f8] sm:$0xff]
    %v346 = vld [vmem:[#allocation7 + $0x300] sm:$0xff]
    %v347 = vld [vmem:[#allocation7 + $0x308] sm:$0xff]
    %v348 = vld [vmem:[#allocation7 + $0x310] sm:$0xff]
    %v349 = vld [vmem:[#allocation7 + $0x318] sm:$0xff]
    %v350 = vld [vmem:[#allocation7 + $0x320] sm:$0xff]
    %v351 = vld [vmem:[#allocation7 + $0x328] sm:$0xff]
    %v352 = vld [vmem:[#allocation7 + $0x330] sm:$0xff]
    %v353 = vld [vmem:[#allocation7 + $0x338] sm:$0xff]
    %v354 = vld [vmem:[#allocation7 + $0x340] sm:$0xff]
    %v355 = vld [vmem:[#allocation7 + $0x348] sm:$0xff]
    %v356 = vld [vmem:[#allocation7 + $0x350] sm:$0xff]
    %v357 = vld [vmem:[#allocation7 + $0x358] sm:$0xff]
    %v358 = vld [vmem:[#allocation7 + $0x360] sm:$0xff]
    %v359 = vld [vmem:[#allocation7 + $0x368] sm:$0xff]
    %v360 = vld [vmem:[#allocation7 + $0x370] sm:$0xff]
    %v361 = vld [vmem:[#allocation7 + $0x378] sm:$0xff]
    %v362 = vld [vmem:[#allocation7 + $0x380] sm:$0xff]
    %v363 = vld [vmem:[#allocation7 + $0x388] sm:$0xff]
    %v364 = vld [vmem:[#allocation7 + $0x390] sm:$0xff]
    %v365 = vld [vmem:[#allocation7 + $0x398] sm:$0xff]
    %v366 = vld [vmem:[#allocation7 + $0x3a0] sm:$0xff]
    %v367 = vld [vmem:[#allocation7 + $0x3a8] sm:$0xff]
    %v368 = vld [vmem:[#allocation7 + $0x3b0] sm:$0xff]
    %v369 = vld [vmem:[#allocation7 + $0x3b8] sm:$0xff]
    %v370 = vld [vmem:[#allocation7 + $0x3c0] sm:$0xff]
    %v371 = vld [vmem:[#allocation7 + $0x3c8] sm:$0xff]
    %v372 = vld [vmem:[#allocation7 + $0x3d0] sm:$0xff]
    %v373 = vld [vmem:[#allocation7 + $0x3d8] sm:$0xff]
    %v374 = vld [vmem:[#allocation7 + $0x3e0] sm:$0xff]
    %v375 = vld [vmem:[#allocation7 + $0x3e8] sm:$0xff]
    %v376 = vld [vmem:[#allocation7 + $0x3f0] sm:$0xff]
    %v377 = vld [vmem:[#allocation7 + $0x3f8] sm:$0xff]
    %v378 = vld [vmem:[#allocation7 + $0x400] sm:$0xff]
    %v379 = vld [vmem:[#allocation7 + $0x408] sm:$0xff]
    %v380 = vld [vmem:[#allocation7 + $0x410] sm:$0xff]
    %v381 = vld [vmem:[#allocation7 + $0x418] sm:$0xff]
    %v382 = vld [vmem:[#allocation7 + $0x420] sm:$0xff]
    %v383 = vld [vmem:[#allocation7 + $0x428] sm:$0xff]
    %v384 = vld [vmem:[#allocation7 + $0x430] sm:$0xff]
    %v385 = vld [vmem:[#allocation7 + $0x438] sm:$0xff]
    %v386 = vld [vmem:[#allocation7 + $0x440] sm:$0xff]
    %v387 = vld [vmem:[#allocation7 + $0x448] sm:$0xff]
    %v388 = vld [vmem:[#allocation7 + $0x450] sm:$0xff]
    %v389 = vld [vmem:[#allocation7 + $0x458] sm:$0xff]
    %v390 = vld [vmem:[#allocation7 + $0x460] sm:$0xff]
    %v391 = vld [vmem:[#allocation7 + $0x468] sm:$0xff]
    %v392 = vld [vmem:[#allocation7 + $0x470] sm:$0xff]
    %v393 = vld [vmem:[#allocation7 + $0x478] sm:$0xff]
    %v394 = vld [vmem:[#allocation7 + $0x480] sm:$0xff]
    %v395 = vld [vmem:[#allocation7 + $0x488] sm:$0xff]
    %v396 = vld [vmem:[#allocation7 + $0x490] sm:$0xff]
    %v397 = vld [vmem:[#allocation7 + $0x498] sm:$0xff]
    %v398 = vld [vmem:[#allocation7 + $0x4a0] sm:$0xff]
    %v399 = vld [vmem:[#allocation7 + $0x4a8] sm:$0xff]
    %v400 = vld [vmem:[#allocation7 + $0x4b0] sm:$0xff]
    %v401 = vld [vmem:[#allocation7 + $0x4b8] sm:$0xff]
    %v402 = vld [vmem:[#allocation7 + $0x4c0] sm:$0xff]
    %v403 = vld [vmem:[#allocation7 + $0x4c8] sm:$0xff]
    %v404 = vld [vmem:[#allocation7 + $0x4d0] sm:$0xff]
    %v405 = vld [vmem:[#allocation7 + $0x4d8] sm:$0xff]
    %v406 = vld [vmem:[#allocation7 + $0x4e0] sm:$0xff]
    %v407 = vld [vmem:[#allocation7 + $0x4e8] sm:$0xff]
    %v408 = vld [vmem:[#allocation7 + $0x4f0] sm:$0xff]
    %v409 = vld [vmem:[#allocation7 + $0x4f8] sm:$0xff]
    %v410 = vld [vmem:[#allocation7 + $0x500] sm:$0xff]
    %v411 = vld [vmem:[#allocation7 + $0x508] sm:$0xff]
    %v412 = vld [vmem:[#allocation7 + $0x510] sm:$0xff]
    %v413 = vld [vmem:[#allocation7 + $0x518] sm:$0xff]
    %v414 = vld [vmem:[#allocation7 + $0x520] sm:$0xff]
    %v415 = vld [vmem:[#allocation7 + $0x528] sm:$0xff]
    %v416 = vld [vmem:[#allocation7 + $0x530] sm:$0xff]
    %v417 = vld [vmem:[#allocation7 + $0x538] sm:$0xff]
    %v418 = vld [vmem:[#allocation7 + $0x540] sm:$0xff]
    %v419 = vld [vmem:[#allocation7 + $0x548] sm:$0xff]
    %v420 = vld [vmem:[#allocation7 + $0x550] sm:$0xff]
    %v421 = vld [vmem:[#allocation7 + $0x558] sm:$0xff]
    %v422 = vld [vmem:[#allocation7 + $0x560] sm:$0xff]
    %v423 = vld [vmem:[#allocation7 + $0x568] sm:$0xff]
    %v424 = vld [vmem:[#allocation7 + $0x570] sm:$0xff]
    %v425 = vld [vmem:[#allocation7 + $0x578] sm:$0xff]
    %v426 = vld [vmem:[#allocation7 + $0x580] sm:$0xff]
    %v427 = vld [vmem:[#allocation7 + $0x588] sm:$0xff]
    %v428 = vld [vmem:[#allocation7 + $0x590] sm:$0xff]
    %v429 = vld [vmem:[#allocation7 + $0x598] sm:$0xff]
    %v430 = vld [vmem:[#allocation7 + $0x5a0] sm:$0xff]
    %v431 = vld [vmem:[#allocation7 + $0x5a8] sm:$0xff]
    %v432 = vld [vmem:[#allocation7 + $0x5b0] sm:$0xff]
    %v433 = vld [vmem:[#allocation7 + $0x5b8] sm:$0xff]
    %v434 = vld [vmem:[#allocation7 + $0x5c0] sm:$0xff]
    %v435 = vld [vmem:[#allocation7 + $0x5c8] sm:$0xff]
    %v436 = vld [vmem:[#allocation7 + $0x5d0] sm:$0xff]
    %v437 = vld [vmem:[#allocation7 + $0x5d8] sm:$0xff]
    %v438 = vld [vmem:[#allocation7 + $0x5e0] sm:$0xff]
    %v439 = vld [vmem:[#allocation7 + $0x5e8] sm:$0xff]
    %v440 = vld [vmem:[#allocation7 + $0x5f0] sm:$0xff]
    %v441 = vld [vmem:[#allocation7 + $0x5f8] sm:$0xff]
    %v442 = vld [vmem:[#allocation7 + $0x600] sm:$0xff]
    %v443 = vld [vmem:[#allocation7 + $0x608] sm:$0xff]
    %v444 = vld [vmem:[#allocation7 + $0x610] sm:$0xff]
    %v445 = vld [vmem:[#allocation7 + $0x618] sm:$0xff]
    %v446 = vld [vmem:[#allocation7 + $0x620] sm:$0xff]
    %v447 = vld [vmem:[#allocation7 + $0x628] sm:$0xff]
    %v448 = vld [vmem:[#allocation7 + $0x630] sm:$0xff]
    %v449 = vld [vmem:[#allocation7 + $0x638] sm:$0xff]
    %v450 = vld [vmem:[#allocation7 + $0x640] sm:$0xff]
    %v451 = vld [vmem:[#allocation7 + $0x648] sm:$0xff]
    %v452 = vld [vmem:[#allocation7 + $0x650] sm:$0xff]
    %v453 = vld [vmem:[#allocation7 + $0x658] sm:$0xff]
    %v454 = vld [vmem:[#allocation7 + $0x660] sm:$0xff]
    %v455 = vld [vmem:[#allocation7 + $0x668] sm:$0xff]
    %v456 = vld [vmem:[#allocation7 + $0x670] sm:$0xff]
    %v457 = vld [vmem:[#allocation7 + $0x678] sm:$0xff]
    %v458 = vld [vmem:[#allocation7 + $0x680] sm:$0xff]
    %v459 = vld [vmem:[#allocation7 + $0x688] sm:$0xff]
    %v460 = vld [vmem:[#allocation7 + $0x690] sm:$0xff]
    %v461 = vld [vmem:[#allocation7 + $0x698] sm:$0xff]
    %v462 = vld [vmem:[#allocation7 + $0x6a0] sm:$0xff]
    %v463 = vld [vmem:[#allocation7 + $0x6a8] sm:$0xff]
    %v464 = vld [vmem:[#allocation7 + $0x6b0] sm:$0xff]
    %v465 = vld [vmem:[#allocation7 + $0x6b8] sm:$0xff]
    %v466 = vld [vmem:[#allocation7 + $0x6c0] sm:$0xff]
    %v467 = vld [vmem:[#allocation7 + $0x6c8] sm:$0xff]
    %v468 = vld [vmem:[#allocation7 + $0x6d0] sm:$0xff]
    %v469 = vld [vmem:[#allocation7 + $0x6d8] sm:$0xff]
    %v470 = vld [vmem:[#allocation7 + $0x6e0] sm:$0xff]
    %v471 = vld [vmem:[#allocation7 + $0x6e8] sm:$0xff]
    %v472 = vld [vmem:[#allocation7 + $0x6f0] sm:$0xff]
    %v473 = vld [vmem:[#allocation7 + $0x6f8] sm:$0xff]
    %v474 = vld [vmem:[#allocation7 + $0x700] sm:$0xff]
    %v475 = vld [vmem:[#allocation7 + $0x708] sm:$0xff]
    %v476 = vld [vmem:[#allocation7 + $0x710] sm:$0xff]
    %v477 = vld [vmem:[#allocation7 + $0x718] sm:$0xff]
    %v478 = vld [vmem:[#allocation7 + $0x720] sm:$0xff]
    %v479 = vld [vmem:[#allocation7 + $0x728] sm:$0xff]
    %v480 = vld [vmem:[#allocation7 + $0x730] sm:$0xff]
    %v481 = vld [vmem:[#allocation7 + $0x738] sm:$0xff]
    %v482 = vld [vmem:[#allocation7 + $0x740] sm:$0xff]
    %v483 = vld [vmem:[#allocation7 + $0x748] sm:$0xff]
    %v484 = vld [vmem:[#allocation7 + $0x750] sm:$0xff]
    %v485 = vld [vmem:[#allocation7 + $0x758] sm:$0xff]
    %v486 = vld [vmem:[#allocation7 + $0x760] sm:$0xff]
    %v487 = vld [vmem:[#allocation7 + $0x768] sm:$0xff]
    %v488 = vld [vmem:[#allocation7 + $0x770] sm:$0xff]
    %v489 = vld [vmem:[#allocation7 + $0x778] sm:$0xff]
    %v490 = vld [vmem:[#allocation7 + $0x780] sm:$0xff]
    %v491 = vld [vmem:[#allocation7 + $0x788] sm:$0xff]
    %v492 = vld [vmem:[#allocation7 + $0x790] sm:$0xff]
    %v493 = vld [vmem:[#allocation7 + $0x798] sm:$0xff]
    %v494 = vld [vmem:[#allocation7 + $0x7a0] sm:$0xff]
    %v495 = vld [vmem:[#allocation7 + $0x7a8] sm:$0xff]
    %v496 = vld [vmem:[#allocation7 + $0x7b0] sm:$0xff]
    %v497 = vld [vmem:[#allocation7 + $0x7b8] sm:$0xff]
    %v498 = vld [vmem:[#allocation7 + $0x7c0] sm:$0xff]
    %v499 = vld [vmem:[#allocation7 + $0x7c8] sm:$0xff]
    %v500 = vld [vmem:[#allocation7 + $0x7d0] sm:$0xff]
    %v501 = vld [vmem:[#allocation7 + $0x7d8] sm:$0xff]
    %v502 = vld [vmem:[#allocation7 + $0x7e0] sm:$0xff]
    %v503 = vld [vmem:[#allocation7 + $0x7e8] sm:$0xff]
    %v504 = vld [vmem:[#allocation7 + $0x7f0] sm:$0xff]
    %v505 = vld [vmem:[#allocation7 + $0x7f8] sm:$0xff]
    %v506 = vld [vmem:[#allocation7 + $0x800] sm:$0xff]
    %v507 = vld [vmem:[#allocation7 + $0x808] sm:$0xff]
    %v508 = vld [vmem:[#allocation7 + $0x810] sm:$0xff]
    %v509 = vld [vmem:[#allocation7 + $0x818] sm:$0xff]
    %v510 = vld [vmem:[#allocation7 + $0x820] sm:$0xff]
    %v511 = vld [vmem:[#allocation7 + $0x828] sm:$0xff]
    %v512 = vld [vmem:[#allocation7 + $0x830] sm:$0xff]
    %v513 = vld [vmem:[#allocation7 + $0x838] sm:$0xff]
    %v514 = vld [vmem:[#allocation7 + $0x840] sm:$0xff]
    %v515 = vld [vmem:[#allocation7 + $0x848] sm:$0xff]
    %v516 = vld [vmem:[#allocation7 + $0x850] sm:$0xff]
    %v517 = vld [vmem:[#allocation7 + $0x858] sm:$0xff]
    %v518 = vld [vmem:[#allocation7 + $0x860] sm:$0xff]
    %v519 = vld [vmem:[#allocation7 + $0x868] sm:$0xff]
    %v520 = vld [vmem:[#allocation7 + $0x870] sm:$0xff]
    %v521 = vld [vmem:[#allocation7 + $0x878] sm:$0xff]
    %v522 = vld [vmem:[#allocation7 + $0x880] sm:$0xff]
    %v523 = vld [vmem:[#allocation7 + $0x888] sm:$0xff]
    %v524 = vld [vmem:[#allocation7 + $0x890] sm:$0xff]
    %v525 = vld [vmem:[#allocation7 + $0x898] sm:$0xff]
    %v526 = vld [vmem:[#allocation7 + $0x8a0] sm:$0xff]
    %v527 = vld [vmem:[#allocation7 + $0x8a8] sm:$0xff]
    %v528 = vld [vmem:[#allocation7 + $0x8b0] sm:$0xff]
    %v529 = vld [vmem:[#allocation7 + $0x8b8] sm:$0xff]
    %v530 = vld [vmem:[#allocation7 + $0x8c0] sm:$0xff]
    %v531 = vld [vmem:[#allocation7 + $0x8c8] sm:$0xff]
    %v532 = vld [vmem:[#allocation7 + $0x8d0] sm:$0xff]
    %v533 = vld [vmem:[#allocation7 + $0x8d8] sm:$0xff]
    %v534 = vld [vmem:[#allocation7 + $0x8e0] sm:$0xff]
    %v535 = vld [vmem:[#allocation7 + $0x8e8] sm:$0xff]
    %v536 = vld [vmem:[#allocation7 + $0x8f0] sm:$0xff]
    %v537 = vld [vmem:[#allocation7 + $0x8f8] sm:$0xff]
    %v538 = vld [vmem:[#allocation7 + $0x900] sm:$0xff]
    %v539 = vld [vmem:[#allocation7 + $0x908] sm:$0xff]
    %v540 = vld [vmem:[#allocation7 + $0x910] sm:$0xff]
    %v541 = vld [vmem:[#allocation7 + $0x918] sm:$0xff]
    %v542 = vld [vmem:[#allocation7 + $0x920] sm:$0xff]
    %v543 = vld [vmem:[#allocation7 + $0x928] sm:$0xff]
    %v544 = vld [vmem:[#allocation7 + $0x930] sm:$0xff]
    %v545 = vld [vmem:[#allocation7 + $0x938] sm:$0xff]
    %v546 = vld [vmem:[#allocation7 + $0x940] sm:$0xff]
    %v547 = vld [vmem:[#allocation7 + $0x948] sm:$0xff]
    %v548 = vld [vmem:[#allocation7 + $0x950] sm:$0xff]
    %v549 = vld [vmem:[#allocation7 + $0x958] sm:$0xff]
    %v550 = vld [vmem:[#allocation7 + $0x960] sm:$0xff]
    %v551 = vld [vmem:[#allocation7 + $0x968] sm:$0xff]
    %v552 = vld [vmem:[#allocation7 + $0x970] sm:$0xff]
    %v553 = vld [vmem:[#allocation7 + $0x978] sm:$0xff]
    %v554 = vld [vmem:[#allocation7 + $0x980] sm:$0xff]
    %v555 = vld [vmem:[#allocation7 + $0x988] sm:$0xff]
    %v556 = vld [vmem:[#allocation7 + $0x990] sm:$0xff]
    %v557 = vld [vmem:[#allocation7 + $0x998] sm:$0xff]
    %v558 = vld [vmem:[#allocation7 + $0x9a0] sm:$0xff]
    %v559 = vld [vmem:[#allocation7 + $0x9a8] sm:$0xff]
    %v560 = vld [vmem:[#allocation7 + $0x9b0] sm:$0xff]
    %v561 = vld [vmem:[#allocation7 + $0x9b8] sm:$0xff]
    %v562 = vld [vmem:[#allocation7 + $0x9c0] sm:$0xff]
    %v563 = vld [vmem:[#allocation7 + $0x9c8] sm:$0xff]
    %v564 = vld [vmem:[#allocation7 + $0x9d0] sm:$0xff]
    %v565 = vld [vmem:[#allocation7 + $0x9d8] sm:$0xff]
    %v566 = vld [vmem:[#allocation7 + $0x9e0] sm:$0xff]
    %v567 = vld [vmem:[#allocation7 + $0x9e8] sm:$0xff]
    %v568 = vld [vmem:[#allocation7 + $0x9f0] sm:$0xff]
    %v569 = vld [vmem:[#allocation7 + $0x9f8] sm:$0xff]
    %v570 = vld [vmem:[#allocation7 + $0xa00] sm:$0xff]
    %v571 = vld [vmem:[#allocation7 + $0xa08] sm:$0xff]
    %v572 = vld [vmem:[#allocation7 + $0xa10] sm:$0xff]
    %v573 = vld [vmem:[#allocation7 + $0xa18] sm:$0xff]
    %v574 = vld [vmem:[#allocation7 + $0xa20] sm:$0xff]
    %v575 = vld [vmem:[#allocation7 + $0xa28] sm:$0xff]
    %v576 = vld [vmem:[#allocation7 + $0xa30] sm:$0xff]
    %v577 = vld [vmem:[#allocation7 + $0xa38] sm:$0xff]
    %v578 = vld [vmem:[#allocation7 + $0xa40] sm:$0xff]
    %v579 = vld [vmem:[#allocation7 + $0xa48] sm:$0xff]
    %v580 = vld [vmem:[#allocation7 + $0xa50] sm:$0xff]
    %v581 = vld [vmem:[#allocation7 + $0xa58] sm:$0xff]
    %v582 = vld [vmem:[#allocation7 + $0xa60] sm:$0xff]
    %v583 = vld [vmem:[#allocation7 + $0xa68] sm:$0xff]
    %v584 = vld [vmem:[#allocation7 + $0xa70] sm:$0xff]
    %v585 = vld [vmem:[#allocation7 + $0xa78] sm:$0xff]
    %v586 = vld [vmem:[#allocation7 + $0xa80] sm:$0xff]
    %v587 = vld [vmem:[#allocation7 + $0xa88] sm:$0xff]
    %v588 = vld [vmem:[#allocation7 + $0xa90] sm:$0xff]
    %v589 = vld [vmem:[#allocation7 + $0xa98] sm:$0xff]
    %v590 = vld [vmem:[#allocation7 + $0xaa0] sm:$0xff]
    %v591 = vld [vmem:[#allocation7 + $0xaa8] sm:$0xff]
    %v592 = vld [vmem:[#allocation7 + $0xab0] sm:$0xff]
    %v593 = vld [vmem:[#allocation7 + $0xab8] sm:$0xff]
    %v594 = vld [vmem:[#allocation7 + $0xac0] sm:$0xff]
    %v595 = vld [vmem:[#allocation7 + $0xac8] sm:$0xff]
    %v596 = vld [vmem:[#allocation7 + $0xad0] sm:$0xff]
    %v597 = vld [vmem:[#allocation7 + $0xad8] sm:$0xff]
    %v598 = vld [vmem:[#allocation7 + $0xae0] sm:$0xff]
    %v599 = vld [vmem:[#allocation7 + $0xae8] sm:$0xff]
    %v600 = vld [vmem:[#allocation7 + $0xaf0] sm:$0xff]
    %v601 = vld [vmem:[#allocation7 + $0xaf8] sm:$0xff]
    %v602 = vld [vmem:[#allocation7 + $0xb00] sm:$0xff]
    %v603 = vld [vmem:[#allocation7 + $0xb08] sm:$0xff]
    %v604 = vld [vmem:[#allocation7 + $0xb10] sm:$0xff]
    %v605 = vld [vmem:[#allocation7 + $0xb18] sm:$0xff]
    %v606 = vld [vmem:[#allocation7 + $0xb20] sm:$0xff]
    %v607 = vld [vmem:[#allocation7 + $0xb28] sm:$0xff]
    %v608 = vld [vmem:[#allocation7 + $0xb30] sm:$0xff]
    %v609 = vld [vmem:[#allocation7 + $0xb38] sm:$0xff]
    %v610 = vld [vmem:[#allocation7 + $0xb40] sm:$0xff]
    %v611 = vld [vmem:[#allocation7 + $0xb48] sm:$0xff]
    %v612 = vld [vmem:[#allocation7 + $0xb50] sm:$0xff]
    %v613 = vld [vmem:[#allocation7 + $0xb58] sm:$0xff]
    %v614 = vld [vmem:[#allocation7 + $0xb60] sm:$0xff]
    %v615 = vld [vmem:[#allocation7 + $0xb68] sm:$0xff]
    %v616 = vld [vmem:[#allocation7 + $0xb70] sm:$0xff]
    %v617 = vld [vmem:[#allocation7 + $0xb78] sm:$0xff]
    %v618 = vld [vmem:[#allocation7 + $0xb80] sm:$0xff]
    %v619 = vld [vmem:[#allocation7 + $0xb88] sm:$0xff]
    %v620 = vld [vmem:[#allocation7 + $0xb90] sm:$0xff]
    %v621 = vld [vmem:[#allocation7 + $0xb98] sm:$0xff]
    %v622 = vld [vmem:[#allocation7 + $0xba0] sm:$0xff]
    %v623 = vld [vmem:[#allocation7 + $0xba8] sm:$0xff]
    %v624 = vld [vmem:[#allocation7 + $0xbb0] sm:$0xff]
    %v625 = vld [vmem:[#allocation7 + $0xbb8] sm:$0xff]
    %v626 = vld [vmem:[#allocation7 + $0xbc0] sm:$0xff]
    %v627 = vld [vmem:[#allocation7 + $0xbc8] sm:$0xff]
    %v628 = vld [vmem:[#allocation7 + $0xbd0] sm:$0xff]
    %v629 = vld [vmem:[#allocation7 + $0xbd8] sm:$0xff]
    %v630 = vld [vmem:[#allocation7 + $0xbe0] sm:$0xff]
    %v631 = vld [vmem:[#allocation7 + $0xbe8] sm:$0xff]
    %v632 = vld [vmem:[#allocation7 + $0xbf0] sm:$0xff]
    %v633 = vld [vmem:[#allocation7 + $0xbf8] sm:$0xff]
    %v634 = vld [vmem:[#allocation8] sm:$0x3]
    %v636 = vlaneseq
    %v637 = vshrl.u32 %v636, 7
    %v638 = vsub.s32 0, %v637
    %v639 = vrot.slane %v634, %v638
    %v640 = vlaneseq
    %v641 = vshrl.u32 %v640, 7
    %v642 = vsub.s32 1, %v641
    %v643 = vrot.slane %v634, %v642
    %v1030 = vunpack.c.l.b16 %v250
    %v1031 = vunpack.c.h.b16 %v250
    %v1032 = vunpack.c.l.b16 %v251
    %v1033 = vunpack.c.h.b16 %v251
    %v1034 = vunpack.c.l.b16 %v252
    %v1035 = vunpack.c.h.b16 %v252
    %v1036 = vunpack.c.l.b16 %v253
    %v1037 = vunpack.c.h.b16 %v253
    %v1038 = vunpack.c.l.b16 %v254
    %v1039 = vunpack.c.h.b16 %v254
    %v1040 = vunpack.c.l.b16 %v255
    %v1041 = vunpack.c.h.b16 %v255
    %v1042 = vunpack.c.l.b16 %v256
    %v1043 = vunpack.c.h.b16 %v256
    %v1044 = vunpack.c.l.b16 %v257
    %v1045 = vunpack.c.h.b16 %v257
    %v1046 = vunpack.c.l.b16 %v258
    %v1047 = vunpack.c.h.b16 %v258
    %v1048 = vunpack.c.l.b16 %v259
    %v1049 = vunpack.c.h.b16 %v259
    %v1050 = vunpack.c.l.b16 %v260
    %v1051 = vunpack.c.h.b16 %v260
    %v1052 = vunpack.c.l.b16 %v261
    %v1053 = vunpack.c.h.b16 %v261
    %v1054 = vunpack.c.l.b16 %v262
    %v1055 = vunpack.c.h.b16 %v262
    %v1056 = vunpack.c.l.b16 %v263
    %v1057 = vunpack.c.h.b16 %v263
    %v1058 = vunpack.c.l.b16 %v264
    %v1059 = vunpack.c.h.b16 %v264
    %v1060 = vunpack.c.l.b16 %v265
    %v1061 = vunpack.c.h.b16 %v265
    %v1062 = vunpack.c.l.b16 %v266
    %v1063 = vunpack.c.h.b16 %v266
    %v1064 = vunpack.c.l.b16 %v267
    %v1065 = vunpack.c.h.b16 %v267
    %v1066 = vunpack.c.l.b16 %v268
    %v1067 = vunpack.c.h.b16 %v268
    %v1068 = vunpack.c.l.b16 %v269
    %v1069 = vunpack.c.h.b16 %v269
    %v1070 = vunpack.c.l.b16 %v270
    %v1071 = vunpack.c.h.b16 %v270
    %v1072 = vunpack.c.l.b16 %v271
    %v1073 = vunpack.c.h.b16 %v271
    %v1074 = vunpack.c.l.b16 %v272
    %v1075 = vunpack.c.h.b16 %v272
    %v1076 = vunpack.c.l.b16 %v273
    %v1077 = vunpack.c.h.b16 %v273
    %v1078 = vunpack.c.l.b16 %v274
    %v1079 = vunpack.c.h.b16 %v274
    %v1080 = vunpack.c.l.b16 %v275
    %v1081 = vunpack.c.h.b16 %v275
    %v1082 = vunpack.c.l.b16 %v276
    %v1083 = vunpack.c.h.b16 %v276
    %v1084 = vunpack.c.l.b16 %v277
    %v1085 = vunpack.c.h.b16 %v277
    %v1086 = vunpack.c.l.b16 %v278
    %v1087 = vunpack.c.h.b16 %v278
    %v1088 = vunpack.c.l.b16 %v279
    %v1089 = vunpack.c.h.b16 %v279
    %v1090 = vunpack.c.l.b16 %v280
    %v1091 = vunpack.c.h.b16 %v280
    %v1092 = vunpack.c.l.b16 %v281
    %v1093 = vunpack.c.h.b16 %v281
    %v1094 = vunpack.c.l.b16 %v282
    %v1095 = vunpack.c.h.b16 %v282
    %v1096 = vunpack.c.l.b16 %v283
    %v1097 = vunpack.c.h.b16 %v283
    %v1098 = vunpack.c.l.b16 %v284
    %v1099 = vunpack.c.h.b16 %v284
    %v1100 = vunpack.c.l.b16 %v285
    %v1101 = vunpack.c.h.b16 %v285
    %v1102 = vunpack.c.l.b16 %v286
    %v1103 = vunpack.c.h.b16 %v286
    %v1104 = vunpack.c.l.b16 %v287
    %v1105 = vunpack.c.h.b16 %v287
    %v1106 = vunpack.c.l.b16 %v288
    %v1107 = vunpack.c.h.b16 %v288
    %v1108 = vunpack.c.l.b16 %v289
    %v1109 = vunpack.c.h.b16 %v289
    %v1110 = vunpack.c.l.b16 %v290
    %v1111 = vunpack.c.h.b16 %v290
    %v1112 = vunpack.c.l.b16 %v291
    %v1113 = vunpack.c.h.b16 %v291
    %v1114 = vunpack.c.l.b16 %v292
    %v1115 = vunpack.c.h.b16 %v292
    %v1116 = vunpack.c.l.b16 %v293
    %v1117 = vunpack.c.h.b16 %v293
    %v1118 = vunpack.c.l.b16 %v294
    %v1119 = vunpack.c.h.b16 %v294
    %v1120 = vunpack.c.l.b16 %v295
    %v1121 = vunpack.c.h.b16 %v295
    %v1122 = vunpack.c.l.b16 %v296
    %v1123 = vunpack.c.h.b16 %v296
    %v1124 = vunpack.c.l.b16 %v297
    %v1125 = vunpack.c.h.b16 %v297
    %v1126 = vunpack.c.l.b16 %v298
    %v1127 = vunpack.c.h.b16 %v298
    %v1128 = vunpack.c.l.b16 %v299
    %v1129 = vunpack.c.h.b16 %v299
    %v1130 = vunpack.c.l.b16 %v300
    %v1131 = vunpack.c.h.b16 %v300
    %v1132 = vunpack.c.l.b16 %v301
    %v1133 = vunpack.c.h.b16 %v301
    %v1134 = vunpack.c.l.b16 %v302
    %v1135 = vunpack.c.h.b16 %v302
    %v1136 = vunpack.c.l.b16 %v303
    %v1137 = vunpack.c.h.b16 %v303
    %v1138 = vunpack.c.l.b16 %v304
    %v1139 = vunpack.c.h.b16 %v304
    %v1140 = vunpack.c.l.b16 %v305
    %v1141 = vunpack.c.h.b16 %v305
    %v1142 = vunpack.c.l.b16 %v306
    %v1143 = vunpack.c.h.b16 %v306
    %v1144 = vunpack.c.l.b16 %v307
    %v1145 = vunpack.c.h.b16 %v307
    %v1146 = vunpack.c.l.b16 %v308
    %v1147 = vunpack.c.h.b16 %v308
    %v1148 = vunpack.c.l.b16 %v309
    %v1149 = vunpack.c.h.b16 %v309
    %v1150 = vunpack.c.l.b16 %v310
    %v1151 = vunpack.c.h.b16 %v310
    %v1152 = vunpack.c.l.b16 %v311
    %v1153 = vunpack.c.h.b16 %v311
    %v1154 = vunpack.c.l.b16 %v312
    %v1155 = vunpack.c.h.b16 %v312
    %v1156 = vunpack.c.l.b16 %v313
    %v1157 = vunpack.c.h.b16 %v313
    %v1158 = vunpack.c.l.b16 %v314
    %v1159 = vunpack.c.h.b16 %v314
    %v1160 = vunpack.c.l.b16 %v315
    %v1161 = vunpack.c.h.b16 %v315
    %v1162 = vunpack.c.l.b16 %v316
    %v1163 = vunpack.c.h.b16 %v316
    %v1164 = vunpack.c.l.b16 %v317
    %v1165 = vunpack.c.h.b16 %v317
    %v1166 = vunpack.c.l.b16 %v318
    %v1167 = vunpack.c.h.b16 %v318
    %v1168 = vunpack.c.l.b16 %v319
    %v1169 = vunpack.c.h.b16 %v319
    %v1170 = vunpack.c.l.b16 %v320
    %v1171 = vunpack.c.h.b16 %v320
    %v1172 = vunpack.c.l.b16 %v321
    %v1173 = vunpack.c.h.b16 %v321
    %v1174 = vunpack.c.l.b16 %v322
    %v1175 = vunpack.c.h.b16 %v322
    %v1176 = vunpack.c.l.b16 %v323
    %v1177 = vunpack.c.h.b16 %v323
    %v1178 = vunpack.c.l.b16 %v324
    %v1179 = vunpack.c.h.b16 %v324
    %v1180 = vunpack.c.l.b16 %v325
    %v1181 = vunpack.c.h.b16 %v325
    %v1182 = vunpack.c.l.b16 %v326
    %v1183 = vunpack.c.h.b16 %v326
    %v1184 = vunpack.c.l.b16 %v327
    %v1185 = vunpack.c.h.b16 %v327
    %v1186 = vunpack.c.l.b16 %v328
    %v1187 = vunpack.c.h.b16 %v328
    %v1188 = vunpack.c.l.b16 %v329
    %v1189 = vunpack.c.h.b16 %v329
    %v1190 = vunpack.c.l.b16 %v330
    %v1191 = vunpack.c.h.b16 %v330
    %v1192 = vunpack.c.l.b16 %v331
    %v1193 = vunpack.c.h.b16 %v331
    %v1194 = vunpack.c.l.b16 %v332
    %v1195 = vunpack.c.h.b16 %v332
    %v1196 = vunpack.c.l.b16 %v333
    %v1197 = vunpack.c.h.b16 %v333
    %v1198 = vunpack.c.l.b16 %v334
    %v1199 = vunpack.c.h.b16 %v334
    %v1200 = vunpack.c.l.b16 %v335
    %v1201 = vunpack.c.h.b16 %v335
    %v1202 = vunpack.c.l.b16 %v336
    %v1203 = vunpack.c.h.b16 %v336
    %v1204 = vunpack.c.l.b16 %v337
    %v1205 = vunpack.c.h.b16 %v337
    %v1206 = vunpack.c.l.b16 %v338
    %v1207 = vunpack.c.h.b16 %v338
    %v1208 = vunpack.c.l.b16 %v339
    %v1209 = vunpack.c.h.b16 %v339
    %v1210 = vunpack.c.l.b16 %v340
    %v1211 = vunpack.c.h.b16 %v340
    %v1212 = vunpack.c.l.b16 %v341
    %v1213 = vunpack.c.h.b16 %v341
    %v1214 = vunpack.c.l.b16 %v342
    %v1215 = vunpack.c.h.b16 %v342
    %v1216 = vunpack.c.l.b16 %v343
    %v1217 = vunpack.c.h.b16 %v343
    %v1218 = vunpack.c.l.b16 %v344
    %v1219 = vunpack.c.h.b16 %v344
    %v1220 = vunpack.c.l.b16 %v345
    %v1221 = vunpack.c.h.b16 %v345
    %v1222 = vunpack.c.l.b16 %v346
    %v1223 = vunpack.c.h.b16 %v346
    %v1224 = vunpack.c.l.b16 %v347
    %v1225 = vunpack.c.h.b16 %v347
    %v1226 = vunpack.c.l.b16 %v348
    %v1227 = vunpack.c.h.b16 %v348
    %v1228 = vunpack.c.l.b16 %v349
    %v1229 = vunpack.c.h.b16 %v349
    %v1230 = vunpack.c.l.b16 %v350
    %v1231 = vunpack.c.h.b16 %v350
    %v1232 = vunpack.c.l.b16 %v351
    %v1233 = vunpack.c.h.b16 %v351
    %v1234 = vunpack.c.l.b16 %v352
    %v1235 = vunpack.c.h.b16 %v352
    %v1236 = vunpack.c.l.b16 %v353
    %v1237 = vunpack.c.h.b16 %v353
    %v1238 = vunpack.c.l.b16 %v354
    %v1239 = vunpack.c.h.b16 %v354
    %v1240 = vunpack.c.l.b16 %v355
    %v1241 = vunpack.c.h.b16 %v355
    %v1242 = vunpack.c.l.b16 %v356
    %v1243 = vunpack.c.h.b16 %v356
    %v1244 = vunpack.c.l.b16 %v357
    %v1245 = vunpack.c.h.b16 %v357
    %v1246 = vunpack.c.l.b16 %v358
    %v1247 = vunpack.c.h.b16 %v358
    %v1248 = vunpack.c.l.b16 %v359
    %v1249 = vunpack.c.h.b16 %v359
    %v1250 = vunpack.c.l.b16 %v360
    %v1251 = vunpack.c.h.b16 %v360
    %v1252 = vunpack.c.l.b16 %v361
    %v1253 = vunpack.c.h.b16 %v361
    %v1254 = vunpack.c.l.b16 %v362
    %v1255 = vunpack.c.h.b16 %v362
    %v1256 = vunpack.c.l.b16 %v363
    %v1257 = vunpack.c.h.b16 %v363
    %v1258 = vunpack.c.l.b16 %v364
    %v1259 = vunpack.c.h.b16 %v364
    %v1260 = vunpack.c.l.b16 %v365
    %v1261 = vunpack.c.h.b16 %v365
    %v1262 = vunpack.c.l.b16 %v366
    %v1263 = vunpack.c.h.b16 %v366
    %v1264 = vunpack.c.l.b16 %v367
    %v1265 = vunpack.c.h.b16 %v367
    %v1266 = vunpack.c.l.b16 %v368
    %v1267 = vunpack.c.h.b16 %v368
    %v1268 = vunpack.c.l.b16 %v369
    %v1269 = vunpack.c.h.b16 %v369
    %v1270 = vunpack.c.l.b16 %v370
    %v1271 = vunpack.c.h.b16 %v370
    %v1272 = vunpack.c.l.b16 %v371
    %v1273 = vunpack.c.h.b16 %v371
    %v1274 = vunpack.c.l.b16 %v372
    %v1275 = vunpack.c.h.b16 %v372
    %v1276 = vunpack.c.l.b16 %v373
    %v1277 = vunpack.c.h.b16 %v373
    %v1278 = vunpack.c.l.b16 %v374
    %v1279 = vunpack.c.h.b16 %v374
    %v1280 = vunpack.c.l.b16 %v375
    %v1281 = vunpack.c.h.b16 %v375
    %v1282 = vunpack.c.l.b16 %v376
    %v1283 = vunpack.c.h.b16 %v376
    %v1284 = vunpack.c.l.b16 %v377
    %v1285 = vunpack.c.h.b16 %v377
    %v1286 = vunpack.c.l.b16 %v378
    %v1287 = vunpack.c.h.b16 %v378
    %v1288 = vunpack.c.l.b16 %v379
    %v1289 = vunpack.c.h.b16 %v379
    %v1290 = vunpack.c.l.b16 %v380
    %v1291 = vunpack.c.h.b16 %v380
    %v1292 = vunpack.c.l.b16 %v381
    %v1293 = vunpack.c.h.b16 %v381
    %v1294 = vunpack.c.l.b16 %v382
    %v1295 = vunpack.c.h.b16 %v382
    %v1296 = vunpack.c.l.b16 %v383
    %v1297 = vunpack.c.h.b16 %v383
    %v1298 = vunpack.c.l.b16 %v384
    %v1299 = vunpack.c.h.b16 %v384
    %v1300 = vunpack.c.l.b16 %v385
    %v1301 = vunpack.c.h.b16 %v385
    %v1302 = vunpack.c.l.b16 %v386
    %v1303 = vunpack.c.h.b16 %v386
    %v1304 = vunpack.c.l.b16 %v387
    %v1305 = vunpack.c.h.b16 %v387
    %v1306 = vunpack.c.l.b16 %v388
    %v1307 = vunpack.c.h.b16 %v388
    %v1308 = vunpack.c.l.b16 %v389
    %v1309 = vunpack.c.h.b16 %v389
    %v1310 = vunpack.c.l.b16 %v390
    %v1311 = vunpack.c.h.b16 %v390
    %v1312 = vunpack.c.l.b16 %v391
    %v1313 = vunpack.c.h.b16 %v391
    %v1314 = vunpack.c.l.b16 %v392
    %v1315 = vunpack.c.h.b16 %v392
    %v1316 = vunpack.c.l.b16 %v393
    %v1317 = vunpack.c.h.b16 %v393
    %v1318 = vunpack.c.l.b16 %v394
    %v1319 = vunpack.c.h.b16 %v394
    %v1320 = vunpack.c.l.b16 %v395
    %v1321 = vunpack.c.h.b16 %v395
    %v1322 = vunpack.c.l.b16 %v396
    %v1323 = vunpack.c.h.b16 %v396
    %v1324 = vunpack.c.l.b16 %v397
    %v1325 = vunpack.c.h.b16 %v397
    %v1326 = vunpack.c.l.b16 %v398
    %v1327 = vunpack.c.h.b16 %v398
    %v1328 = vunpack.c.l.b16 %v399
    %v1329 = vunpack.c.h.b16 %v399
    %v1330 = vunpack.c.l.b16 %v400
    %v1331 = vunpack.c.h.b16 %v400
    %v1332 = vunpack.c.l.b16 %v401
    %v1333 = vunpack.c.h.b16 %v401
    %v1334 = vunpack.c.l.b16 %v402
    %v1335 = vunpack.c.h.b16 %v402
    %v1336 = vunpack.c.l.b16 %v403
    %v1337 = vunpack.c.h.b16 %v403
    %v1338 = vunpack.c.l.b16 %v404
    %v1339 = vunpack.c.h.b16 %v404
    %v1340 = vunpack.c.l.b16 %v405
    %v1341 = vunpack.c.h.b16 %v405
    %v1342 = vunpack.c.l.b16 %v406
    %v1343 = vunpack.c.h.b16 %v406
    %v1344 = vunpack.c.l.b16 %v407
    %v1345 = vunpack.c.h.b16 %v407
    %v1346 = vunpack.c.l.b16 %v408
    %v1347 = vunpack.c.h.b16 %v408
    %v1348 = vunpack.c.l.b16 %v409
    %v1349 = vunpack.c.h.b16 %v409
    %v1350 = vunpack.c.l.b16 %v410
    %v1351 = vunpack.c.h.b16 %v410
    %v1352 = vunpack.c.l.b16 %v411
    %v1353 = vunpack.c.h.b16 %v411
    %v1354 = vunpack.c.l.b16 %v412
    %v1355 = vunpack.c.h.b16 %v412
    %v1356 = vunpack.c.l.b16 %v413
    %v1357 = vunpack.c.h.b16 %v413
    %v1358 = vunpack.c.l.b16 %v414
    %v1359 = vunpack.c.h.b16 %v414
    %v1360 = vunpack.c.l.b16 %v415
    %v1361 = vunpack.c.h.b16 %v415
    %v1362 = vunpack.c.l.b16 %v416
    %v1363 = vunpack.c.h.b16 %v416
    %v1364 = vunpack.c.l.b16 %v417
    %v1365 = vunpack.c.h.b16 %v417
    %v1366 = vunpack.c.l.b16 %v418
    %v1367 = vunpack.c.h.b16 %v418
    %v1368 = vunpack.c.l.b16 %v419
    %v1369 = vunpack.c.h.b16 %v419
    %v1370 = vunpack.c.l.b16 %v420
    %v1371 = vunpack.c.h.b16 %v420
    %v1372 = vunpack.c.l.b16 %v421
    %v1373 = vunpack.c.h.b16 %v421
    %v1374 = vunpack.c.l.b16 %v422
    %v1375 = vunpack.c.h.b16 %v422
    %v1376 = vunpack.c.l.b16 %v423
    %v1377 = vunpack.c.h.b16 %v423
    %v1378 = vunpack.c.l.b16 %v424
    %v1379 = vunpack.c.h.b16 %v424
    %v1380 = vunpack.c.l.b16 %v425
    %v1381 = vunpack.c.h.b16 %v425
    %v1382 = vunpack.c.l.b16 %v426
    %v1383 = vunpack.c.h.b16 %v426
    %v1384 = vunpack.c.l.b16 %v427
    %v1385 = vunpack.c.h.b16 %v427
    %v1386 = vunpack.c.l.b16 %v428
    %v1387 = vunpack.c.h.b16 %v428
    %v1388 = vunpack.c.l.b16 %v429
    %v1389 = vunpack.c.h.b16 %v429
    %v1390 = vunpack.c.l.b16 %v430
    %v1391 = vunpack.c.h.b16 %v430
    %v1392 = vunpack.c.l.b16 %v431
    %v1393 = vunpack.c.h.b16 %v431
    %v1394 = vunpack.c.l.b16 %v432
    %v1395 = vunpack.c.h.b16 %v432
    %v1396 = vunpack.c.l.b16 %v433
    %v1397 = vunpack.c.h.b16 %v433
    %v1398 = vunpack.c.l.b16 %v434
    %v1399 = vunpack.c.h.b16 %v434
    %v1400 = vunpack.c.l.b16 %v435
    %v1401 = vunpack.c.h.b16 %v435
    %v1402 = vunpack.c.l.b16 %v436
    %v1403 = vunpack.c.h.b16 %v436
    %v1404 = vunpack.c.l.b16 %v437
    %v1405 = vunpack.c.h.b16 %v437
    %v1406 = vunpack.c.l.b16 %v438
    %v1407 = vunpack.c.h.b16 %v438
    %v1408 = vunpack.c.l.b16 %v439
    %v1409 = vunpack.c.h.b16 %v439
    %v1410 = vunpack.c.l.b16 %v440
    %v1411 = vunpack.c.h.b16 %v440
    %v1412 = vunpack.c.l.b16 %v441
    %v1413 = vunpack.c.h.b16 %v441
    %v1414 = vunpack.c.l.b16 %v442
    %v1415 = vunpack.c.h.b16 %v442
    %v1416 = vunpack.c.l.b16 %v443
    %v1417 = vunpack.c.h.b16 %v443
    %v1418 = vunpack.c.l.b16 %v444
    %v1419 = vunpack.c.h.b16 %v444
    %v1420 = vunpack.c.l.b16 %v445
    %v1421 = vunpack.c.h.b16 %v445
    %v1422 = vunpack.c.l.b16 %v446
    %v1423 = vunpack.c.h.b16 %v446
    %v1424 = vunpack.c.l.b16 %v447
    %v1425 = vunpack.c.h.b16 %v447
    %v1426 = vunpack.c.l.b16 %v448
    %v1427 = vunpack.c.h.b16 %v448
    %v1428 = vunpack.c.l.b16 %v449
    %v1429 = vunpack.c.h.b16 %v449
    %v1430 = vunpack.c.l.b16 %v450
    %v1431 = vunpack.c.h.b16 %v450
    %v1432 = vunpack.c.l.b16 %v451
    %v1433 = vunpack.c.h.b16 %v451
    %v1434 = vunpack.c.l.b16 %v452
    %v1435 = vunpack.c.h.b16 %v452
    %v1436 = vunpack.c.l.b16 %v453
    %v1437 = vunpack.c.h.b16 %v453
    %v1438 = vunpack.c.l.b16 %v454
    %v1439 = vunpack.c.h.b16 %v454
    %v1440 = vunpack.c.l.b16 %v455
    %v1441 = vunpack.c.h.b16 %v455
    %v1442 = vunpack.c.l.b16 %v456
    %v1443 = vunpack.c.h.b16 %v456
    %v1444 = vunpack.c.l.b16 %v457
    %v1445 = vunpack.c.h.b16 %v457
    %v1446 = vunpack.c.l.b16 %v458
    %v1447 = vunpack.c.h.b16 %v458
    %v1448 = vunpack.c.l.b16 %v459
    %v1449 = vunpack.c.h.b16 %v459
    %v1450 = vunpack.c.l.b16 %v460
    %v1451 = vunpack.c.h.b16 %v460
    %v1452 = vunpack.c.l.b16 %v461
    %v1453 = vunpack.c.h.b16 %v461
    %v1454 = vunpack.c.l.b16 %v462
    %v1455 = vunpack.c.h.b16 %v462
    %v1456 = vunpack.c.l.b16 %v463
    %v1457 = vunpack.c.h.b16 %v463
    %v1458 = vunpack.c.l.b16 %v464
    %v1459 = vunpack.c.h.b16 %v464
    %v1460 = vunpack.c.l.b16 %v465
    %v1461 = vunpack.c.h.b16 %v465
    %v1462 = vunpack.c.l.b16 %v466
    %v1463 = vunpack.c.h.b16 %v466
    %v1464 = vunpack.c.l.b16 %v467
    %v1465 = vunpack.c.h.b16 %v467
    %v1466 = vunpack.c.l.b16 %v468
    %v1467 = vunpack.c.h.b16 %v468
    %v1468 = vunpack.c.l.b16 %v469
    %v1469 = vunpack.c.h.b16 %v469
    %v1470 = vunpack.c.l.b16 %v470
    %v1471 = vunpack.c.h.b16 %v470
    %v1472 = vunpack.c.l.b16 %v471
    %v1473 = vunpack.c.h.b16 %v471
    %v1474 = vunpack.c.l.b16 %v472
    %v1475 = vunpack.c.h.b16 %v472
    %v1476 = vunpack.c.l.b16 %v473
    %v1477 = vunpack.c.h.b16 %v473
    %v1478 = vunpack.c.l.b16 %v474
    %v1479 = vunpack.c.h.b16 %v474
    %v1480 = vunpack.c.l.b16 %v475
    %v1481 = vunpack.c.h.b16 %v475
    %v1482 = vunpack.c.l.b16 %v476
    %v1483 = vunpack.c.h.b16 %v476
    %v1484 = vunpack.c.l.b16 %v477
    %v1485 = vunpack.c.h.b16 %v477
    %v1486 = vunpack.c.l.b16 %v478
    %v1487 = vunpack.c.h.b16 %v478
    %v1488 = vunpack.c.l.b16 %v479
    %v1489 = vunpack.c.h.b16 %v479
    %v1490 = vunpack.c.l.b16 %v480
    %v1491 = vunpack.c.h.b16 %v480
    %v1492 = vunpack.c.l.b16 %v481
    %v1493 = vunpack.c.h.b16 %v481
    %v1494 = vunpack.c.l.b16 %v482
    %v1495 = vunpack.c.h.b16 %v482
    %v1496 = vunpack.c.l.b16 %v483
    %v1497 = vunpack.c.h.b16 %v483
    %v1498 = vunpack.c.l.b16 %v484
    %v1499 = vunpack.c.h.b16 %v484
    %v1500 = vunpack.c.l.b16 %v485
    %v1501 = vunpack.c.h.b16 %v485
    %v1502 = vunpack.c.l.b16 %v486
    %v1503 = vunpack.c.h.b16 %v486
    %v1504 = vunpack.c.l.b16 %v487
    %v1505 = vunpack.c.h.b16 %v487
    %v1506 = vunpack.c.l.b16 %v488
    %v1507 = vunpack.c.h.b16 %v488
    %v1508 = vunpack.c.l.b16 %v489
    %v1509 = vunpack.c.h.b16 %v489
    %v1510 = vunpack.c.l.b16 %v490
    %v1511 = vunpack.c.h.b16 %v490
    %v1512 = vunpack.c.l.b16 %v491
    %v1513 = vunpack.c.h.b16 %v491
    %v1514 = vunpack.c.l.b16 %v492
    %v1515 = vunpack.c.h.b16 %v492
    %v1516 = vunpack.c.l.b16 %v493
    %v1517 = vunpack.c.h.b16 %v493
    %v1518 = vunpack.c.l.b16 %v494
    %v1519 = vunpack.c.h.b16 %v494
    %v1520 = vunpack.c.l.b16 %v495
    %v1521 = vunpack.c.h.b16 %v495
    %v1522 = vunpack.c.l.b16 %v496
    %v1523 = vunpack.c.h.b16 %v496
    %v1524 = vunpack.c.l.b16 %v497
    %v1525 = vunpack.c.h.b16 %v497
    %v1526 = vunpack.c.l.b16 %v498
    %v1527 = vunpack.c.h.b16 %v498
    %v1528 = vunpack.c.l.b16 %v499
    %v1529 = vunpack.c.h.b16 %v499
    %v1530 = vunpack.c.l.b16 %v500
    %v1531 = vunpack.c.h.b16 %v500
    %v1532 = vunpack.c.l.b16 %v501
    %v1533 = vunpack.c.h.b16 %v501
    %v1534 = vunpack.c.l.b16 %v502
    %v1535 = vunpack.c.h.b16 %v502
    %v1536 = vunpack.c.l.b16 %v503
    %v1537 = vunpack.c.h.b16 %v503
    %v1538 = vunpack.c.l.b16 %v504
    %v1539 = vunpack.c.h.b16 %v504
    %v1540 = vunpack.c.l.b16 %v505
    %v1541 = vunpack.c.h.b16 %v505
    %v1542 = vunpack.c.l.b16 %v506
    %v1543 = vunpack.c.h.b16 %v506
    %v1544 = vunpack.c.l.b16 %v507
    %v1545 = vunpack.c.h.b16 %v507
    %v1546 = vunpack.c.l.b16 %v508
    %v1547 = vunpack.c.h.b16 %v508
    %v1548 = vunpack.c.l.b16 %v509
    %v1549 = vunpack.c.h.b16 %v509
    %v1550 = vunpack.c.l.b16 %v510
    %v1551 = vunpack.c.h.b16 %v510
    %v1552 = vunpack.c.l.b16 %v511
    %v1553 = vunpack.c.h.b16 %v511
    %v1554 = vunpack.c.l.b16 %v512
    %v1555 = vunpack.c.h.b16 %v512
    %v1556 = vunpack.c.l.b16 %v513
    %v1557 = vunpack.c.h.b16 %v513
    %v1558 = vunpack.c.l.b16 %v514
    %v1559 = vunpack.c.h.b16 %v514
    %v1560 = vunpack.c.l.b16 %v515
    %v1561 = vunpack.c.h.b16 %v515
    %v1562 = vunpack.c.l.b16 %v516
    %v1563 = vunpack.c.h.b16 %v516
    %v1564 = vunpack.c.l.b16 %v517
    %v1565 = vunpack.c.h.b16 %v517
    %v1566 = vunpack.c.l.b16 %v518
    %v1567 = vunpack.c.h.b16 %v518
    %v1568 = vunpack.c.l.b16 %v519
    %v1569 = vunpack.c.h.b16 %v519
    %v1570 = vunpack.c.l.b16 %v520
    %v1571 = vunpack.c.h.b16 %v520
    %v1572 = vunpack.c.l.b16 %v521
    %v1573 = vunpack.c.h.b16 %v521
    %v1574 = vunpack.c.l.b16 %v522
    %v1575 = vunpack.c.h.b16 %v522
    %v1576 = vunpack.c.l.b16 %v523
    %v1577 = vunpack.c.h.b16 %v523
    %v1578 = vunpack.c.l.b16 %v524
    %v1579 = vunpack.c.h.b16 %v524
    %v1580 = vunpack.c.l.b16 %v525
    %v1581 = vunpack.c.h.b16 %v525
    %v1582 = vunpack.c.l.b16 %v526
    %v1583 = vunpack.c.h.b16 %v526
    %v1584 = vunpack.c.l.b16 %v527
    %v1585 = vunpack.c.h.b16 %v527
    %v1586 = vunpack.c.l.b16 %v528
    %v1587 = vunpack.c.h.b16 %v528
    %v1588 = vunpack.c.l.b16 %v529
    %v1589 = vunpack.c.h.b16 %v529
    %v1590 = vunpack.c.l.b16 %v530
    %v1591 = vunpack.c.h.b16 %v530
    %v1592 = vunpack.c.l.b16 %v531
    %v1593 = vunpack.c.h.b16 %v531
    %v1594 = vunpack.c.l.b16 %v532
    %v1595 = vunpack.c.h.b16 %v532
    %v1596 = vunpack.c.l.b16 %v533
    %v1597 = vunpack.c.h.b16 %v533
    %v1598 = vunpack.c.l.b16 %v534
    %v1599 = vunpack.c.h.b16 %v534
    %v1600 = vunpack.c.l.b16 %v535
    %v1601 = vunpack.c.h.b16 %v535
    %v1602 = vunpack.c.l.b16 %v536
    %v1603 = vunpack.c.h.b16 %v536
    %v1604 = vunpack.c.l.b16 %v537
    %v1605 = vunpack.c.h.b16 %v537
    %v1606 = vunpack.c.l.b16 %v538
    %v1607 = vunpack.c.h.b16 %v538
    %v1608 = vunpack.c.l.b16 %v539
    %v1609 = vunpack.c.h.b16 %v539
    %v1610 = vunpack.c.l.b16 %v540
    %v1611 = vunpack.c.h.b16 %v540
    %v1612 = vunpack.c.l.b16 %v541
    %v1613 = vunpack.c.h.b16 %v541
    %v1614 = vunpack.c.l.b16 %v542
    %v1615 = vunpack.c.h.b16 %v542
    %v1616 = vunpack.c.l.b16 %v543
    %v1617 = vunpack.c.h.b16 %v543
    %v1618 = vunpack.c.l.b16 %v544
    %v1619 = vunpack.c.h.b16 %v544
    %v1620 = vunpack.c.l.b16 %v545
    %v1621 = vunpack.c.h.b16 %v545
    %v1622 = vunpack.c.l.b16 %v546
    %v1623 = vunpack.c.h.b16 %v546
    %v1624 = vunpack.c.l.b16 %v547
    %v1625 = vunpack.c.h.b16 %v547
    %v1626 = vunpack.c.l.b16 %v548
    %v1627 = vunpack.c.h.b16 %v548
    %v1628 = vunpack.c.l.b16 %v549
    %v1629 = vunpack.c.h.b16 %v549
    %v1630 = vunpack.c.l.b16 %v550
    %v1631 = vunpack.c.h.b16 %v550
    %v1632 = vunpack.c.l.b16 %v551
    %v1633 = vunpack.c.h.b16 %v551
    %v1634 = vunpack.c.l.b16 %v552
    %v1635 = vunpack.c.h.b16 %v552
    %v1636 = vunpack.c.l.b16 %v553
    %v1637 = vunpack.c.h.b16 %v553
    %v1638 = vunpack.c.l.b16 %v554
    %v1639 = vunpack.c.h.b16 %v554
    %v1640 = vunpack.c.l.b16 %v555
    %v1641 = vunpack.c.h.b16 %v555
    %v1642 = vunpack.c.l.b16 %v556
    %v1643 = vunpack.c.h.b16 %v556
    %v1644 = vunpack.c.l.b16 %v557
    %v1645 = vunpack.c.h.b16 %v557
    %v1646 = vunpack.c.l.b16 %v558
    %v1647 = vunpack.c.h.b16 %v558
    %v1648 = vunpack.c.l.b16 %v559
    %v1649 = vunpack.c.h.b16 %v559
    %v1650 = vunpack.c.l.b16 %v560
    %v1651 = vunpack.c.h.b16 %v560
    %v1652 = vunpack.c.l.b16 %v561
    %v1653 = vunpack.c.h.b16 %v561
    %v1654 = vunpack.c.l.b16 %v562
    %v1655 = vunpack.c.h.b16 %v562
    %v1656 = vunpack.c.l.b16 %v563
    %v1657 = vunpack.c.h.b16 %v563
    %v1658 = vunpack.c.l.b16 %v564
    %v1659 = vunpack.c.h.b16 %v564
    %v1660 = vunpack.c.l.b16 %v565
    %v1661 = vunpack.c.h.b16 %v565
    %v1662 = vunpack.c.l.b16 %v566
    %v1663 = vunpack.c.h.b16 %v566
    %v1664 = vunpack.c.l.b16 %v567
    %v1665 = vunpack.c.h.b16 %v567
    %v1666 = vunpack.c.l.b16 %v568
    %v1667 = vunpack.c.h.b16 %v568
    %v1668 = vunpack.c.l.b16 %v569
    %v1669 = vunpack.c.h.b16 %v569
    %v1670 = vunpack.c.l.b16 %v570
    %v1671 = vunpack.c.h.b16 %v570
    %v1672 = vunpack.c.l.b16 %v571
    %v1673 = vunpack.c.h.b16 %v571
    %v1674 = vunpack.c.l.b16 %v572
    %v1675 = vunpack.c.h.b16 %v572
    %v1676 = vunpack.c.l.b16 %v573
    %v1677 = vunpack.c.h.b16 %v573
    %v1678 = vunpack.c.l.b16 %v574
    %v1679 = vunpack.c.h.b16 %v574
    %v1680 = vunpack.c.l.b16 %v575
    %v1681 = vunpack.c.h.b16 %v575
    %v1682 = vunpack.c.l.b16 %v576
    %v1683 = vunpack.c.h.b16 %v576
    %v1684 = vunpack.c.l.b16 %v577
    %v1685 = vunpack.c.h.b16 %v577
    %v1686 = vunpack.c.l.b16 %v578
    %v1687 = vunpack.c.h.b16 %v578
    %v1688 = vunpack.c.l.b16 %v579
    %v1689 = vunpack.c.h.b16 %v579
    %v1690 = vunpack.c.l.b16 %v580
    %v1691 = vunpack.c.h.b16 %v580
    %v1692 = vunpack.c.l.b16 %v581
    %v1693 = vunpack.c.h.b16 %v581
    %v1694 = vunpack.c.l.b16 %v582
    %v1695 = vunpack.c.h.b16 %v582
    %v1696 = vunpack.c.l.b16 %v583
    %v1697 = vunpack.c.h.b16 %v583
    %v1698 = vunpack.c.l.b16 %v584
    %v1699 = vunpack.c.h.b16 %v584
    %v1700 = vunpack.c.l.b16 %v585
    %v1701 = vunpack.c.h.b16 %v585
    %v1702 = vunpack.c.l.b16 %v586
    %v1703 = vunpack.c.h.b16 %v586
    %v1704 = vunpack.c.l.b16 %v587
    %v1705 = vunpack.c.h.b16 %v587
    %v1706 = vunpack.c.l.b16 %v588
    %v1707 = vunpack.c.h.b16 %v588
    %v1708 = vunpack.c.l.b16 %v589
    %v1709 = vunpack.c.h.b16 %v589
    %v1710 = vunpack.c.l.b16 %v590
    %v1711 = vunpack.c.h.b16 %v590
    %v1712 = vunpack.c.l.b16 %v591
    %v1713 = vunpack.c.h.b16 %v591
    %v1714 = vunpack.c.l.b16 %v592
    %v1715 = vunpack.c.h.b16 %v592
    %v1716 = vunpack.c.l.b16 %v593
    %v1717 = vunpack.c.h.b16 %v593
    %v1718 = vunpack.c.l.b16 %v594
    %v1719 = vunpack.c.h.b16 %v594
    %v1720 = vunpack.c.l.b16 %v595
    %v1721 = vunpack.c.h.b16 %v595
    %v1722 = vunpack.c.l.b16 %v596
    %v1723 = vunpack.c.h.b16 %v596
    %v1724 = vunpack.c.l.b16 %v597
    %v1725 = vunpack.c.h.b16 %v597
    %v1726 = vunpack.c.l.b16 %v598
    %v1727 = vunpack.c.h.b16 %v598
    %v1728 = vunpack.c.l.b16 %v599
    %v1729 = vunpack.c.h.b16 %v599
    %v1730 = vunpack.c.l.b16 %v600
    %v1731 = vunpack.c.h.b16 %v600
    %v1732 = vunpack.c.l.b16 %v601
    %v1733 = vunpack.c.h.b16 %v601
    %v1734 = vunpack.c.l.b16 %v602
    %v1735 = vunpack.c.h.b16 %v602
    %v1736 = vunpack.c.l.b16 %v603
    %v1737 = vunpack.c.h.b16 %v603
    %v1738 = vunpack.c.l.b16 %v604
    %v1739 = vunpack.c.h.b16 %v604
    %v1740 = vunpack.c.l.b16 %v605
    %v1741 = vunpack.c.h.b16 %v605
    %v1742 = vunpack.c.l.b16 %v606
    %v1743 = vunpack.c.h.b16 %v606
    %v1744 = vunpack.c.l.b16 %v607
    %v1745 = vunpack.c.h.b16 %v607
    %v1746 = vunpack.c.l.b16 %v608
    %v1747 = vunpack.c.h.b16 %v608
    %v1748 = vunpack.c.l.b16 %v609
    %v1749 = vunpack.c.h.b16 %v609
    %v1750 = vunpack.c.l.b16 %v610
    %v1751 = vunpack.c.h.b16 %v610
    %v1752 = vunpack.c.l.b16 %v611
    %v1753 = vunpack.c.h.b16 %v611
    %v1754 = vunpack.c.l.b16 %v612
    %v1755 = vunpack.c.h.b16 %v612
    %v1756 = vunpack.c.l.b16 %v613
    %v1757 = vunpack.c.h.b16 %v613
    %v1758 = vunpack.c.l.b16 %v614
    %v1759 = vunpack.c.h.b16 %v614
    %v1760 = vunpack.c.l.b16 %v615
    %v1761 = vunpack.c.h.b16 %v615
    %v1762 = vunpack.c.l.b16 %v616
    %v1763 = vunpack.c.h.b16 %v616
    %v1764 = vunpack.c.l.b16 %v617
    %v1765 = vunpack.c.h.b16 %v617
    %v1766 = vunpack.c.l.b16 %v618
    %v1767 = vunpack.c.h.b16 %v618
    %v1768 = vunpack.c.l.b16 %v619
    %v1769 = vunpack.c.h.b16 %v619
    %v1770 = vunpack.c.l.b16 %v620
    %v1771 = vunpack.c.h.b16 %v620
    %v1772 = vunpack.c.l.b16 %v621
    %v1773 = vunpack.c.h.b16 %v621
    %v1774 = vunpack.c.l.b16 %v622
    %v1775 = vunpack.c.h.b16 %v622
    %v1776 = vunpack.c.l.b16 %v623
    %v1777 = vunpack.c.h.b16 %v623
    %v1778 = vunpack.c.l.b16 %v624
    %v1779 = vunpack.c.h.b16 %v624
    %v1780 = vunpack.c.l.b16 %v625
    %v1781 = vunpack.c.h.b16 %v625
    %v1782 = vunpack.c.l.b16 %v626
    %v1783 = vunpack.c.h.b16 %v626
    %v1784 = vunpack.c.l.b16 %v627
    %v1785 = vunpack.c.h.b16 %v627
    %v1786 = vunpack.c.l.b16 %v628
    %v1787 = vunpack.c.h.b16 %v628
    %v1788 = vunpack.c.l.b16 %v629
    %v1789 = vunpack.c.h.b16 %v629
    %v1790 = vunpack.c.l.b16 %v630
    %v1791 = vunpack.c.h.b16 %v630
    %v1792 = vunpack.c.l.b16 %v631
    %v1793 = vunpack.c.h.b16 %v631
    %v1794 = vunpack.c.l.b16 %v632
    %v1795 = vunpack.c.h.b16 %v632
    %v1796 = vunpack.c.l.b16 %v633
    %v1797 = vunpack.c.h.b16 %v633
    %v1798 = vpack.c.b16 %v1032, %v1030
    %v1799 = vpack.c.b16 %v1033, %v1031
    %v1800 = vpack.c.b16 %v1036, %v1034
    %v1801 = vpack.c.b16 %v1037, %v1035
    %v1802 = vpack.c.b16 %v1040, %v1038
    %v1803 = vpack.c.b16 %v1041, %v1039
    %v1804 = vpack.c.b16 %v1044, %v1042
    %v1805 = vpack.c.b16 %v1045, %v1043
    %v1806 = vpack.c.b16 %v1048, %v1046
    %v1807 = vpack.c.b16 %v1049, %v1047
    %v1808 = vpack.c.b16 %v1052, %v1050
    %v1809 = vpack.c.b16 %v1053, %v1051
    %v1810 = vpack.c.b16 %v1056, %v1054
    %v1811 = vpack.c.b16 %v1057, %v1055
    %v1812 = vpack.c.b16 %v1060, %v1058
    %v1813 = vpack.c.b16 %v1061, %v1059
    %v1814 = vpack.c.b16 %v1064, %v1062
    %v1815 = vpack.c.b16 %v1065, %v1063
    %v1816 = vpack.c.b16 %v1068, %v1066
    %v1817 = vpack.c.b16 %v1069, %v1067
    %v1818 = vpack.c.b16 %v1072, %v1070
    %v1819 = vpack.c.b16 %v1073, %v1071
    %v1820 = vpack.c.b16 %v1076, %v1074
    %v1821 = vpack.c.b16 %v1077, %v1075
    %v1822 = vpack.c.b16 %v1080, %v1078
    %v1823 = vpack.c.b16 %v1081, %v1079
    %v1824 = vpack.c.b16 %v1084, %v1082
    %v1825 = vpack.c.b16 %v1085, %v1083
    %v1826 = vpack.c.b16 %v1088, %v1086
    %v1827 = vpack.c.b16 %v1089, %v1087
    %v1828 = vpack.c.b16 %v1092, %v1090
    %v1829 = vpack.c.b16 %v1093, %v1091
    %v1830 = vpack.c.b16 %v1096, %v1094
    %v1831 = vpack.c.b16 %v1097, %v1095
    %v1832 = vpack.c.b16 %v1100, %v1098
    %v1833 = vpack.c.b16 %v1101, %v1099
    %v1834 = vpack.c.b16 %v1104, %v1102
    %v1835 = vpack.c.b16 %v1105, %v1103
    %v1836 = vpack.c.b16 %v1108, %v1106
    %v1837 = vpack.c.b16 %v1109, %v1107
    %v1838 = vpack.c.b16 %v1112, %v1110
    %v1839 = vpack.c.b16 %v1113, %v1111
    %v1840 = vpack.c.b16 %v1116, %v1114
    %v1841 = vpack.c.b16 %v1117, %v1115
    %v1842 = vpack.c.b16 %v1120, %v1118
    %v1843 = vpack.c.b16 %v1121, %v1119
    %v1844 = vpack.c.b16 %v1124, %v1122
    %v1845 = vpack.c.b16 %v1125, %v1123
    %v1846 = vpack.c.b16 %v1128, %v1126
    %v1847 = vpack.c.b16 %v1129, %v1127
    %v1848 = vpack.c.b16 %v1132, %v1130
    %v1849 = vpack.c.b16 %v1133, %v1131
    %v1850 = vpack.c.b16 %v1136, %v1134
    %v1851 = vpack.c.b16 %v1137, %v1135
    %v1852 = vpack.c.b16 %v1140, %v1138
    %v1853 = vpack.c.b16 %v1141, %v1139
    %v1854 = vpack.c.b16 %v1144, %v1142
    %v1855 = vpack.c.b16 %v1145, %v1143
    %v1856 = vpack.c.b16 %v1148, %v1146
    %v1857 = vpack.c.b16 %v1149, %v1147
    %v1858 = vpack.c.b16 %v1152, %v1150
    %v1859 = vpack.c.b16 %v1153, %v1151
    %v1860 = vpack.c.b16 %v1156, %v1154
    %v1861 = vpack.c.b16 %v1157, %v1155
    %v1862 = vpack.c.b16 %v1160, %v1158
    %v1863 = vpack.c.b16 %v1161, %v1159
    %v1864 = vpack.c.b16 %v1164, %v1162
    %v1865 = vpack.c.b16 %v1165, %v1163
    %v1866 = vpack.c.b16 %v1168, %v1166
    %v1867 = vpack.c.b16 %v1169, %v1167
    %v1868 = vpack.c.b16 %v1172, %v1170
    %v1869 = vpack.c.b16 %v1173, %v1171
    %v1870 = vpack.c.b16 %v1176, %v1174
    %v1871 = vpack.c.b16 %v1177, %v1175
    %v1872 = vpack.c.b16 %v1180, %v1178
    %v1873 = vpack.c.b16 %v1181, %v1179
    %v1874 = vpack.c.b16 %v1184, %v1182
    %v1875 = vpack.c.b16 %v1185, %v1183
    %v1876 = vpack.c.b16 %v1188, %v1186
    %v1877 = vpack.c.b16 %v1189, %v1187
    %v1878 = vpack.c.b16 %v1192, %v1190
    %v1879 = vpack.c.b16 %v1193, %v1191
    %v1880 = vpack.c.b16 %v1196, %v1194
    %v1881 = vpack.c.b16 %v1197, %v1195
    %v1882 = vpack.c.b16 %v1200, %v1198
    %v1883 = vpack.c.b16 %v1201, %v1199
    %v1884 = vpack.c.b16 %v1204, %v1202
    %v1885 = vpack.c.b16 %v1205, %v1203
    %v1886 = vpack.c.b16 %v1208, %v1206
    %v1887 = vpack.c.b16 %v1209, %v1207
    %v1888 = vpack.c.b16 %v1212, %v1210
    %v1889 = vpack.c.b16 %v1213, %v1211
    %v1890 = vpack.c.b16 %v1216, %v1214
    %v1891 = vpack.c.b16 %v1217, %v1215
    %v1892 = vpack.c.b16 %v1220, %v1218
    %v1893 = vpack.c.b16 %v1221, %v1219
    %v1894 = vpack.c.b16 %v1224, %v1222
    %v1895 = vpack.c.b16 %v1225, %v1223
    %v1896 = vpack.c.b16 %v1228, %v1226
    %v1897 = vpack.c.b16 %v1229, %v1227
    %v1898 = vpack.c.b16 %v1232, %v1230
    %v1899 = vpack.c.b16 %v1233, %v1231
    %v1900 = vpack.c.b16 %v1236, %v1234
    %v1901 = vpack.c.b16 %v1237, %v1235
    %v1902 = vpack.c.b16 %v1240, %v1238
    %v1903 = vpack.c.b16 %v1241, %v1239
    %v1904 = vpack.c.b16 %v1244, %v1242
    %v1905 = vpack.c.b16 %v1245, %v1243
    %v1906 = vpack.c.b16 %v1248, %v1246
    %v1907 = vpack.c.b16 %v1249, %v1247
    %v1908 = vpack.c.b16 %v1252, %v1250
    %v1909 = vpack.c.b16 %v1253, %v1251
    %v1910 = vpack.c.b16 %v1256, %v1254
    %v1911 = vpack.c.b16 %v1257, %v1255
    %v1912 = vpack.c.b16 %v1260, %v1258
    %v1913 = vpack.c.b16 %v1261, %v1259
    %v1914 = vpack.c.b16 %v1264, %v1262
    %v1915 = vpack.c.b16 %v1265, %v1263
    %v1916 = vpack.c.b16 %v1268, %v1266
    %v1917 = vpack.c.b16 %v1269, %v1267
    %v1918 = vpack.c.b16 %v1272, %v1270
    %v1919 = vpack.c.b16 %v1273, %v1271
    %v1920 = vpack.c.b16 %v1276, %v1274
    %v1921 = vpack.c.b16 %v1277, %v1275
    %v1922 = vpack.c.b16 %v1280, %v1278
    %v1923 = vpack.c.b16 %v1281, %v1279
    %v1924 = vpack.c.b16 %v1284, %v1282
    %v1925 = vpack.c.b16 %v1285, %v1283
    %v1926 = vpack.c.b16 %v1288, %v1286
    %v1927 = vpack.c.b16 %v1289, %v1287
    %v1928 = vpack.c.b16 %v1292, %v1290
    %v1929 = vpack.c.b16 %v1293, %v1291
    %v1930 = vpack.c.b16 %v1296, %v1294
    %v1931 = vpack.c.b16 %v1297, %v1295
    %v1932 = vpack.c.b16 %v1300, %v1298
    %v1933 = vpack.c.b16 %v1301, %v1299
    %v1934 = vpack.c.b16 %v1304, %v1302
    %v1935 = vpack.c.b16 %v1305, %v1303
    %v1936 = vpack.c.b16 %v1308, %v1306
    %v1937 = vpack.c.b16 %v1309, %v1307
    %v1938 = vpack.c.b16 %v1312, %v1310
    %v1939 = vpack.c.b16 %v1313, %v1311
    %v1940 = vpack.c.b16 %v1316, %v1314
    %v1941 = vpack.c.b16 %v1317, %v1315
    %v1942 = vpack.c.b16 %v1320, %v1318
    %v1943 = vpack.c.b16 %v1321, %v1319
    %v1944 = vpack.c.b16 %v1324, %v1322
    %v1945 = vpack.c.b16 %v1325, %v1323
    %v1946 = vpack.c.b16 %v1328, %v1326
    %v1947 = vpack.c.b16 %v1329, %v1327
    %v1948 = vpack.c.b16 %v1332, %v1330
    %v1949 = vpack.c.b16 %v1333, %v1331
    %v1950 = vpack.c.b16 %v1336, %v1334
    %v1951 = vpack.c.b16 %v1337, %v1335
    %v1952 = vpack.c.b16 %v1340, %v1338
    %v1953 = vpack.c.b16 %v1341, %v1339
    %v1954 = vpack.c.b16 %v1344, %v1342
    %v1955 = vpack.c.b16 %v1345, %v1343
    %v1956 = vpack.c.b16 %v1348, %v1346
    %v1957 = vpack.c.b16 %v1349, %v1347
    %v1958 = vpack.c.b16 %v1352, %v1350
    %v1959 = vpack.c.b16 %v1353, %v1351
    %v1960 = vpack.c.b16 %v1356, %v1354
    %v1961 = vpack.c.b16 %v1357, %v1355
    %v1962 = vpack.c.b16 %v1360, %v1358
    %v1963 = vpack.c.b16 %v1361, %v1359
    %v1964 = vpack.c.b16 %v1364, %v1362
    %v1965 = vpack.c.b16 %v1365, %v1363
    %v1966 = vpack.c.b16 %v1368, %v1366
    %v1967 = vpack.c.b16 %v1369, %v1367
    %v1968 = vpack.c.b16 %v1372, %v1370
    %v1969 = vpack.c.b16 %v1373, %v1371
    %v1970 = vpack.c.b16 %v1376, %v1374
    %v1971 = vpack.c.b16 %v1377, %v1375
    %v1972 = vpack.c.b16 %v1380, %v1378
    %v1973 = vpack.c.b16 %v1381, %v1379
    %v1974 = vpack.c.b16 %v1384, %v1382
    %v1975 = vpack.c.b16 %v1385, %v1383
    %v1976 = vpack.c.b16 %v1388, %v1386
    %v1977 = vpack.c.b16 %v1389, %v1387
    %v1978 = vpack.c.b16 %v1392, %v1390
    %v1979 = vpack.c.b16 %v1393, %v1391
    %v1980 = vpack.c.b16 %v1396, %v1394
    %v1981 = vpack.c.b16 %v1397, %v1395
    %v1982 = vpack.c.b16 %v1400, %v1398
    %v1983 = vpack.c.b16 %v1401, %v1399
    %v1984 = vpack.c.b16 %v1404, %v1402
    %v1985 = vpack.c.b16 %v1405, %v1403
    %v1986 = vpack.c.b16 %v1408, %v1406
    %v1987 = vpack.c.b16 %v1409, %v1407
    %v1988 = vpack.c.b16 %v1412, %v1410
    %v1989 = vpack.c.b16 %v1413, %v1411
    %v1990 = vpack.c.b16 %v1416, %v1414
    %v1991 = vpack.c.b16 %v1417, %v1415
    %v1992 = vpack.c.b16 %v1420, %v1418
    %v1993 = vpack.c.b16 %v1421, %v1419
    %v1994 = vpack.c.b16 %v1424, %v1422
    %v1995 = vpack.c.b16 %v1425, %v1423
    %v1996 = vpack.c.b16 %v1428, %v1426
    %v1997 = vpack.c.b16 %v1429, %v1427
    %v1998 = vpack.c.b16 %v1432, %v1430
    %v1999 = vpack.c.b16 %v1433, %v1431
    %v2000 = vpack.c.b16 %v1436, %v1434
    %v2001 = vpack.c.b16 %v1437, %v1435
    %v2002 = vpack.c.b16 %v1440, %v1438
    %v2003 = vpack.c.b16 %v1441, %v1439
    %v2004 = vpack.c.b16 %v1444, %v1442
    %v2005 = vpack.c.b16 %v1445, %v1443
    %v2006 = vpack.c.b16 %v1448, %v1446
    %v2007 = vpack.c.b16 %v1449, %v1447
    %v2008 = vpack.c.b16 %v1452, %v1450
    %v2009 = vpack.c.b16 %v1453, %v1451
    %v2010 = vpack.c.b16 %v1456, %v1454
    %v2011 = vpack.c.b16 %v1457, %v1455
    %v2012 = vpack.c.b16 %v1460, %v1458
    %v2013 = vpack.c.b16 %v1461, %v1459
    %v2014 = vpack.c.b16 %v1464, %v1462
    %v2015 = vpack.c.b16 %v1465, %v1463
    %v2016 = vpack.c.b16 %v1468, %v1466
    %v2017 = vpack.c.b16 %v1469, %v1467
    %v2018 = vpack.c.b16 %v1472, %v1470
    %v2019 = vpack.c.b16 %v1473, %v1471
    %v2020 = vpack.c.b16 %v1476, %v1474
    %v2021 = vpack.c.b16 %v1477, %v1475
    %v2022 = vpack.c.b16 %v1480, %v1478
    %v2023 = vpack.c.b16 %v1481, %v1479
    %v2024 = vpack.c.b16 %v1484, %v1482
    %v2025 = vpack.c.b16 %v1485, %v1483
    %v2026 = vpack.c.b16 %v1488, %v1486
    %v2027 = vpack.c.b16 %v1489, %v1487
    %v2028 = vpack.c.b16 %v1492, %v1490
    %v2029 = vpack.c.b16 %v1493, %v1491
    %v2030 = vpack.c.b16 %v1496, %v1494
    %v2031 = vpack.c.b16 %v1497, %v1495
    %v2032 = vpack.c.b16 %v1500, %v1498
    %v2033 = vpack.c.b16 %v1501, %v1499
    %v2034 = vpack.c.b16 %v1504, %v1502
    %v2035 = vpack.c.b16 %v1505, %v1503
    %v2036 = vpack.c.b16 %v1508, %v1506
    %v2037 = vpack.c.b16 %v1509, %v1507
    %v2038 = vpack.c.b16 %v1512, %v1510
    %v2039 = vpack.c.b16 %v1513, %v1511
    %v2040 = vpack.c.b16 %v1516, %v1514
    %v2041 = vpack.c.b16 %v1517, %v1515
    %v2042 = vpack.c.b16 %v1520, %v1518
    %v2043 = vpack.c.b16 %v1521, %v1519
    %v2044 = vpack.c.b16 %v1524, %v1522
    %v2045 = vpack.c.b16 %v1525, %v1523
    %v2046 = vpack.c.b16 %v1528, %v1526
    %v2047 = vpack.c.b16 %v1529, %v1527
    %v2048 = vpack.c.b16 %v1532, %v1530
    %v2049 = vpack.c.b16 %v1533, %v1531
    %v2050 = vpack.c.b16 %v1536, %v1534
    %v2051 = vpack.c.b16 %v1537, %v1535
    %v2052 = vpack.c.b16 %v1540, %v1538
    %v2053 = vpack.c.b16 %v1541, %v1539
    %v2054 = vpack.c.b16 %v1544, %v1542
    %v2055 = vpack.c.b16 %v1545, %v1543
    %v2056 = vpack.c.b16 %v1548, %v1546
    %v2057 = vpack.c.b16 %v1549, %v1547
    %v2058 = vpack.c.b16 %v1552, %v1550
    %v2059 = vpack.c.b16 %v1553, %v1551
    %v2060 = vpack.c.b16 %v1556, %v1554
    %v2061 = vpack.c.b16 %v1557, %v1555
    %v2062 = vpack.c.b16 %v1560, %v1558
    %v2063 = vpack.c.b16 %v1561, %v1559
    %v2064 = vpack.c.b16 %v1564, %v1562
    %v2065 = vpack.c.b16 %v1565, %v1563
    %v2066 = vpack.c.b16 %v1568, %v1566
    %v2067 = vpack.c.b16 %v1569, %v1567
    %v2068 = vpack.c.b16 %v1572, %v1570
    %v2069 = vpack.c.b16 %v1573, %v1571
    %v2070 = vpack.c.b16 %v1576, %v1574
    %v2071 = vpack.c.b16 %v1577, %v1575
    %v2072 = vpack.c.b16 %v1580, %v1578
    %v2073 = vpack.c.b16 %v1581, %v1579
    %v2074 = vpack.c.b16 %v1584, %v1582
    %v2075 = vpack.c.b16 %v1585, %v1583
    %v2076 = vpack.c.b16 %v1588, %v1586
    %v2077 = vpack.c.b16 %v1589, %v1587
    %v2078 = vpack.c.b16 %v1592, %v1590
    %v2079 = vpack.c.b16 %v1593, %v1591
    %v2080 = vpack.c.b16 %v1596, %v1594
    %v2081 = vpack.c.b16 %v1597, %v1595
    %v2082 = vpack.c.b16 %v1600, %v1598
    %v2083 = vpack.c.b16 %v1601, %v1599
    %v2084 = vpack.c.b16 %v1604, %v1602
    %v2085 = vpack.c.b16 %v1605, %v1603
    %v2086 = vpack.c.b16 %v1608, %v1606
    %v2087 = vpack.c.b16 %v1609, %v1607
    %v2088 = vpack.c.b16 %v1612, %v1610
    %v2089 = vpack.c.b16 %v1613, %v1611
    %v2090 = vpack.c.b16 %v1616, %v1614
    %v2091 = vpack.c.b16 %v1617, %v1615
    %v2092 = vpack.c.b16 %v1620, %v1618
    %v2093 = vpack.c.b16 %v1621, %v1619
    %v2094 = vpack.c.b16 %v1624, %v1622
    %v2095 = vpack.c.b16 %v1625, %v1623
    %v2096 = vpack.c.b16 %v1628, %v1626
    %v2097 = vpack.c.b16 %v1629, %v1627
    %v2098 = vpack.c.b16 %v1632, %v1630
    %v2099 = vpack.c.b16 %v1633, %v1631
    %v2100 = vpack.c.b16 %v1636, %v1634
    %v2101 = vpack.c.b16 %v1637, %v1635
    %v2102 = vpack.c.b16 %v1640, %v1638
    %v2103 = vpack.c.b16 %v1641, %v1639
    %v2104 = vpack.c.b16 %v1644, %v1642
    %v2105 = vpack.c.b16 %v1645, %v1643
    %v2106 = vpack.c.b16 %v1648, %v1646
    %v2107 = vpack.c.b16 %v1649, %v1647
    %v2108 = vpack.c.b16 %v1652, %v1650
    %v2109 = vpack.c.b16 %v1653, %v1651
    %v2110 = vpack.c.b16 %v1656, %v1654
    %v2111 = vpack.c.b16 %v1657, %v1655
    %v2112 = vpack.c.b16 %v1660, %v1658
    %v2113 = vpack.c.b16 %v1661, %v1659
    %v2114 = vpack.c.b16 %v1664, %v1662
    %v2115 = vpack.c.b16 %v1665, %v1663
    %v2116 = vpack.c.b16 %v1668, %v1666
    %v2117 = vpack.c.b16 %v1669, %v1667
    %v2118 = vpack.c.b16 %v1672, %v1670
    %v2119 = vpack.c.b16 %v1673, %v1671
    %v2120 = vpack.c.b16 %v1676, %v1674
    %v2121 = vpack.c.b16 %v1677, %v1675
    %v2122 = vpack.c.b16 %v1680, %v1678
    %v2123 = vpack.c.b16 %v1681, %v1679
    %v2124 = vpack.c.b16 %v1684, %v1682
    %v2125 = vpack.c.b16 %v1685, %v1683
    %v2126 = vpack.c.b16 %v1688, %v1686
    %v2127 = vpack.c.b16 %v1689, %v1687
    %v2128 = vpack.c.b16 %v1692, %v1690
    %v2129 = vpack.c.b16 %v1693, %v1691
    %v2130 = vpack.c.b16 %v1696, %v1694
    %v2131 = vpack.c.b16 %v1697, %v1695
    %v2132 = vpack.c.b16 %v1700, %v1698
    %v2133 = vpack.c.b16 %v1701, %v1699
    %v2134 = vpack.c.b16 %v1704, %v1702
    %v2135 = vpack.c.b16 %v1705, %v1703
    %v2136 = vpack.c.b16 %v1708, %v1706
    %v2137 = vpack.c.b16 %v1709, %v1707
    %v2138 = vpack.c.b16 %v1712, %v1710
    %v2139 = vpack.c.b16 %v1713, %v1711
    %v2140 = vpack.c.b16 %v1716, %v1714
    %v2141 = vpack.c.b16 %v1717, %v1715
    %v2142 = vpack.c.b16 %v1720, %v1718
    %v2143 = vpack.c.b16 %v1721, %v1719
    %v2144 = vpack.c.b16 %v1724, %v1722
    %v2145 = vpack.c.b16 %v1725, %v1723
    %v2146 = vpack.c.b16 %v1728, %v1726
    %v2147 = vpack.c.b16 %v1729, %v1727
    %v2148 = vpack.c.b16 %v1732, %v1730
    %v2149 = vpack.c.b16 %v1733, %v1731
    %v2150 = vpack.c.b16 %v1736, %v1734
    %v2151 = vpack.c.b16 %v1737, %v1735
    %v2152 = vpack.c.b16 %v1740, %v1738
    %v2153 = vpack.c.b16 %v1741, %v1739
    %v2154 = vpack.c.b16 %v1744, %v1742
    %v2155 = vpack.c.b16 %v1745, %v1743
    %v2156 = vpack.c.b16 %v1748, %v1746
    %v2157 = vpack.c.b16 %v1749, %v1747
    %v2158 = vpack.c.b16 %v1752, %v1750
    %v2159 = vpack.c.b16 %v1753, %v1751
    %v2160 = vpack.c.b16 %v1756, %v1754
    %v2161 = vpack.c.b16 %v1757, %v1755
    %v2162 = vpack.c.b16 %v1760, %v1758
    %v2163 = vpack.c.b16 %v1761, %v1759
    %v2164 = vpack.c.b16 %v1764, %v1762
    %v2165 = vpack.c.b16 %v1765, %v1763
    %v2166 = vpack.c.b16 %v1768, %v1766
    %v2167 = vpack.c.b16 %v1769, %v1767
    %v2168 = vpack.c.b16 %v1772, %v1770
    %v2169 = vpack.c.b16 %v1773, %v1771
    %v2170 = vpack.c.b16 %v1776, %v1774
    %v2171 = vpack.c.b16 %v1777, %v1775
    %v2172 = vpack.c.b16 %v1780, %v1778
    %v2173 = vpack.c.b16 %v1781, %v1779
    %v2174 = vpack.c.b16 %v1784, %v1782
    %v2175 = vpack.c.b16 %v1785, %v1783
    %v2176 = vpack.c.b16 %v1788, %v1786
    %v2177 = vpack.c.b16 %v1789, %v1787
    %v2178 = vpack.c.b16 %v1792, %v1790
    %v2179 = vpack.c.b16 %v1793, %v1791
    %v2180 = vpack.c.b16 %v1796, %v1794
    %v2181 = vpack.c.b16 %v1797, %v1795
    %2566 = vmatprep.subr.bf16.mxu0 %v1813
    %2567 = vmatpush1.bf16.msra.mxu0 %v1812
    %2568 = vmatprep.subr.bf16.mxu0 %v1811
    %2569 = vmatpush1.bf16.msra.mxu0 %v1810
    %2570 = vmatprep.subr.bf16.mxu0 %v1809
    %2571 = vmatpush1.bf16.msra.mxu0 %v1808
    %2572 = vmatprep.subr.bf16.mxu0 %v1807
    %2573 = vmatpush1.bf16.msra.mxu0 %v1806
    %2574 = vmatprep.subr.bf16.mxu0 %v1805
    %2575 = vmatpush1.bf16.msra.mxu0 %v1804
    %2576 = vmatprep.subr.bf16.mxu0 %v1803
    %2577 = vmatpush1.bf16.msra.mxu0 %v1802
    %2578 = vmatprep.subr.bf16.mxu0 %v1801
    %2579 = vmatpush1.bf16.msra.mxu0 %v1800
    %2580 = vmatprep.subr.bf16.mxu0 %v1799
    %2581 = vmatpush1.bf16.msra.mxu0 %v1798
    %2582 = vmatprep.subr.bf16.mxu0 %v1829
    %2583 = vmatpush2.bf16.msra.mxu0 %v1828
    %2584 = vmatprep.subr.bf16.mxu0 %v1827
    %2585 = vmatpush2.bf16.msra.mxu0 %v1826
    %2586 = vmatprep.subr.bf16.mxu0 %v1825
    %2587 = vmatpush2.bf16.msra.mxu0 %v1824
    %2588 = vmatprep.subr.bf16.mxu0 %v1823
    %2589 = vmatpush2.bf16.msra.mxu0 %v1822
    %2590 = vmatprep.subr.bf16.mxu0 %v1821
    %2591 = vmatpush2.bf16.msra.mxu0 %v1820
    %2592 = vmatprep.subr.bf16.mxu0 %v1819
    %2593 = vmatpush2.bf16.msra.mxu0 %v1818
    %2594 = vmatprep.subr.bf16.mxu0 %v1817
    %2595 = vmatpush2.bf16.msra.mxu0 %v1816
    %2596 = vmatprep.subr.bf16.mxu0 %v1815
    %2597 = vmatpush2.bf16.msra.mxu0 %v1814
    %2598 = vmatprep.mubr.bf16.mxu0 %v227
    %2599 = vmatmul.mubr.bf16.gmra.mxu0 %v226
    %v2600 = vpop.f32.mrf.mxu0
    %v2601 = vadd.f32 %v639, %v2600
    %v2602 = vpop.f32.mrf.mxu0
    %v2603 = vadd.f32 %v643, %v2602
    %v2604 = vpop.f32.mrf.mxu0
    %v2605 = vpop.f32.mrf.mxu0
    %2606 = vdwg.mxu0
    %2607 = vmatprep.subr.bf16.mxu0 %v1845
    %2608 = vmatpush1.bf16.msra.mxu0 %v1844
    %2609 = vmatprep.subr.bf16.mxu0 %v1843
    %2610 = vmatpush1.bf16.msra.mxu0 %v1842
    %2611 = vmatprep.subr.bf16.mxu0 %v1841
    %2612 = vmatpush1.bf16.msra.mxu0 %v1840
    %2613 = vmatprep.subr.bf16.mxu0 %v1839
    %2614 = vmatpush1.bf16.msra.mxu0 %v1838
    %2615 = vmatprep.subr.bf16.mxu0 %v1837
    %2616 = vmatpush1.bf16.msra.mxu0 %v1836
    %2617 = vmatprep.subr.bf16.mxu0 %v1835
    %2618 = vmatpush1.bf16.msra.mxu0 %v1834
    %2619 = vmatprep.subr.bf16.mxu0 %v1833
    %2620 = vmatpush1.bf16.msra.mxu0 %v1832
    %2621 = vmatprep.subr.bf16.mxu0 %v1831
    %2622 = vmatpush1.bf16.msra.mxu0 %v1830
    %2623 = vmatprep.subr.bf16.mxu0 %v1861
    %2624 = vmatpush2.bf16.msra.mxu0 %v1860
    %2625 = vmatprep.subr.bf16.mxu0 %v1859
    %2626 = vmatpush2.bf16.msra.mxu0 %v1858
    %2627 = vmatprep.subr.bf16.mxu0 %v1857
    %2628 = vmatpush2.bf16.msra.mxu0 %v1856
    %2629 = vmatprep.subr.bf16.mxu0 %v1855
    %2630 = vmatpush2.bf16.msra.mxu0 %v1854
    %2631 = vmatprep.subr.bf16.mxu0 %v1853
    %2632 = vmatpush2.bf16.msra.mxu0 %v1852
    %2633 = vmatprep.subr.bf16.mxu0 %v1851
    %2634 = vmatpush2.bf16.msra.mxu0 %v1850
    %2635 = vmatprep.subr.bf16.mxu0 %v1849
    %2636 = vmatpush2.bf16.msra.mxu0 %v1848
    %2637 = vmatprep.subr.bf16.mxu0 %v1847
    %2638 = vmatpush2.bf16.msra.mxu0 %v1846
    %2639 = vmatprep.mubr.bf16.mxu0 %v229
    %2640 = vmatmul.mubr.bf16.gmra.mxu0 %v228
    %v2641 = vpop.f32.mrf.mxu0
    %v2642 = vadd.f32 %v2601, %v2641
    %v2643 = vpop.f32.mrf.mxu0
    %v2644 = vadd.f32 %v2603, %v2643
    %v2645 = vpop.f32.mrf.mxu0
    %v2646 = vpop.f32.mrf.mxu0
    %2647 = vdwg.mxu0
    %2648 = vmatprep.subr.bf16.mxu0 %v1877
    %2649 = vmatpush1.bf16.msra.mxu0 %v1876
    %2650 = vmatprep.subr.bf16.mxu0 %v1875
    %2651 = vmatpush1.bf16.msra.mxu0 %v1874
    %2652 = vmatprep.subr.bf16.mxu0 %v1873
    %2653 = vmatpush1.bf16.msra.mxu0 %v1872
    %2654 = vmatprep.subr.bf16.mxu0 %v1871
    %2655 = vmatpush1.bf16.msra.mxu0 %v1870
    %2656 = vmatprep.subr.bf16.mxu0 %v1869
    %2657 = vmatpush1.bf16.msra.mxu0 %v1868
    %2658 = vmatprep.subr.bf16.mxu0 %v1867
    %2659 = vmatpush1.bf16.msra.mxu0 %v1866
    %2660 = vmatprep.subr.bf16.mxu0 %v1865
    %2661 = vmatpush1.bf16.msra.mxu0 %v1864
    %2662 = vmatprep.subr.bf16.mxu0 %v1863
    %2663 = vmatpush1.bf16.msra.mxu0 %v1862
    %2664 = vmatprep.subr.bf16.mxu0 %v1893
    %2665 = vmatpush2.bf16.msra.mxu0 %v1892
    %2666 = vmatprep.subr.bf16.mxu0 %v1891
    %2667 = vmatpush2.bf16.msra.mxu0 %v1890
    %2668 = vmatprep.subr.bf16.mxu0 %v1889
    %2669 = vmatpush2.bf16.msra.mxu0 %v1888
    %2670 = vmatprep.subr.bf16.mxu0 %v1887
    %2671 = vmatpush2.bf16.msra.mxu0 %v1886
    %2672 = vmatprep.subr.bf16.mxu0 %v1885
    %2673 = vmatpush2.bf16.msra.mxu0 %v1884
    %2674 = vmatprep.subr.bf16.mxu0 %v1883
    %2675 = vmatpush2.bf16.msra.mxu0 %v1882
    %2676 = vmatprep.subr.bf16.mxu0 %v1881
    %2677 = vmatpush2.bf16.msra.mxu0 %v1880
    %2678 = vmatprep.subr.bf16.mxu0 %v1879
    %2679 = vmatpush2.bf16.msra.mxu0 %v1878
    %2680 = vmatprep.mubr.bf16.mxu0 %v231
    %2681 = vmatmul.mubr.bf16.gmra.mxu0 %v230
    %v2682 = vpop.f32.mrf.mxu0
    %v2683 = vadd.f32 %v2642, %v2682
    %v2684 = vpop.f32.mrf.mxu0
    %v2685 = vadd.f32 %v2644, %v2684
    %v2686 = vpop.f32.mrf.mxu0
    %v2687 = vpop.f32.mrf.mxu0
    %2688 = vdwg.mxu0
    %2689 = vmatprep.subr.bf16.mxu0 %v1909
    %2690 = vmatpush1.bf16.msra.mxu0 %v1908
    %2691 = vmatprep.subr.bf16.mxu0 %v1907
    %2692 = vmatpush1.bf16.msra.mxu0 %v1906
    %2693 = vmatprep.subr.bf16.mxu0 %v1905
    %2694 = vmatpush1.bf16.msra.mxu0 %v1904
    %2695 = vmatprep.subr.bf16.mxu0 %v1903
    %2696 = vmatpush1.bf16.msra.mxu0 %v1902
    %2697 = vmatprep.subr.bf16.mxu0 %v1901
    %2698 = vmatpush1.bf16.msra.mxu0 %v1900
    %2699 = vmatprep.subr.bf16.mxu0 %v1899
    %2700 = vmatpush1.bf16.msra.mxu0 %v1898
    %2701 = vmatprep.subr.bf16.mxu0 %v1897
    %2702 = vmatpush1.bf16.msra.mxu0 %v1896
    %2703 = vmatprep.subr.bf16.mxu0 %v1895
    %2704 = vmatpush1.bf16.msra.mxu0 %v1894
    %2705 = vmatprep.subr.bf16.mxu0 %v1925
    %2706 = vmatpush2.bf16.msra.mxu0 %v1924
    %2707 = vmatprep.subr.bf16.mxu0 %v1923
    %2708 = vmatpush2.bf16.msra.mxu0 %v1922
    %2709 = vmatprep.subr.bf16.mxu0 %v1921
    %2710 = vmatpush2.bf16.msra.mxu0 %v1920
    %2711 = vmatprep.subr.bf16.mxu0 %v1919
    %2712 = vmatpush2.bf16.msra.mxu0 %v1918
    %2713 = vmatprep.subr.bf16.mxu0 %v1917
    %2714 = vmatpush2.bf16.msra.mxu0 %v1916
    %2715 = vmatprep.subr.bf16.mxu0 %v1915
    %2716 = vmatpush2.bf16.msra.mxu0 %v1914
    %2717 = vmatprep.subr.bf16.mxu0 %v1913
    %2718 = vmatpush2.bf16.msra.mxu0 %v1912
    %2719 = vmatprep.subr.bf16.mxu0 %v1911
    %2720 = vmatpush2.bf16.msra.mxu0 %v1910
    %2721 = vmatprep.mubr.bf16.mxu0 %v233
    %2722 = vmatmul.mubr.bf16.gmra.mxu0 %v232
    %v2723 = vpop.f32.mrf.mxu0
    %v2724 = vadd.f32 %v2683, %v2723
    %v2725 = vpop.f32.mrf.mxu0
    %v2726 = vadd.f32 %v2685, %v2725
    %v2727 = vpop.f32.mrf.mxu0
    %v2728 = vpop.f32.mrf.mxu0
    %2729 = vdwg.mxu0
    %2730 = vmatprep.subr.bf16.mxu0 %v1941
    %2731 = vmatpush1.bf16.msra.mxu0 %v1940
    %2732 = vmatprep.subr.bf16.mxu0 %v1939
    %2733 = vmatpush1.bf16.msra.mxu0 %v1938
    %2734 = vmatprep.subr.bf16.mxu0 %v1937
    %2735 = vmatpush1.bf16.msra.mxu0 %v1936
    %2736 = vmatprep.subr.bf16.mxu0 %v1935
    %2737 = vmatpush1.bf16.msra.mxu0 %v1934
    %2738 = vmatprep.subr.bf16.mxu0 %v1933
    %2739 = vmatpush1.bf16.msra.mxu0 %v1932
    %2740 = vmatprep.subr.bf16.mxu0 %v1931
    %2741 = vmatpush1.bf16.msra.mxu0 %v1930
    %2742 = vmatprep.subr.bf16.mxu0 %v1929
    %2743 = vmatpush1.bf16.msra.mxu0 %v1928
    %2744 = vmatprep.subr.bf16.mxu0 %v1927
    %2745 = vmatpush1.bf16.msra.mxu0 %v1926
    %2746 = vmatprep.subr.bf16.mxu0 %v1957
    %2747 = vmatpush2.bf16.msra.mxu0 %v1956
    %2748 = vmatprep.subr.bf16.mxu0 %v1955
    %2749 = vmatpush2.bf16.msra.mxu0 %v1954
    %2750 = vmatprep.subr.bf16.mxu0 %v1953
    %2751 = vmatpush2.bf16.msra.mxu0 %v1952
    %2752 = vmatprep.subr.bf16.mxu0 %v1951
    %2753 = vmatpush2.bf16.msra.mxu0 %v1950
    %2754 = vmatprep.subr.bf16.mxu0 %v1949
    %2755 = vmatpush2.bf16.msra.mxu0 %v1948
    %2756 = vmatprep.subr.bf16.mxu0 %v1947
    %2757 = vmatpush2.bf16.msra.mxu0 %v1946
    %2758 = vmatprep.subr.bf16.mxu0 %v1945
    %2759 = vmatpush2.bf16.msra.mxu0 %v1944
    %2760 = vmatprep.subr.bf16.mxu0 %v1943
    %2761 = vmatpush2.bf16.msra.mxu0 %v1942
    %2762 = vmatprep.mubr.bf16.mxu0 %v235
    %2763 = vmatmul.mubr.bf16.gmra.mxu0 %v234
    %v2764 = vpop.f32.mrf.mxu0
    %v2765 = vadd.f32 %v2724, %v2764
    %v2766 = vpop.f32.mrf.mxu0
    %v2767 = vadd.f32 %v2726, %v2766
    %v2768 = vpop.f32.mrf.mxu0
    %v2769 = vpop.f32.mrf.mxu0
    %2770 = vdwg.mxu0
    %2771 = vmatprep.subr.bf16.mxu0 %v1973
    %2772 = vmatpush1.bf16.msra.mxu0 %v1972
    %2773 = vmatprep.subr.bf16.mxu0 %v1971
    %2774 = vmatpush1.bf16.msra.mxu0 %v1970
    %2775 = vmatprep.subr.bf16.mxu0 %v1969
    %2776 = vmatpush1.bf16.msra.mxu0 %v1968
    %2777 = vmatprep.subr.bf16.mxu0 %v1967
    %2778 = vmatpush1.bf16.msra.mxu0 %v1966
    %2779 = vmatprep.subr.bf16.mxu0 %v1965
    %2780 = vmatpush1.bf16.msra.mxu0 %v1964
    %2781 = vmatprep.subr.bf16.mxu0 %v1963
    %2782 = vmatpush1.bf16.msra.mxu0 %v1962
    %2783 = vmatprep.subr.bf16.mxu0 %v1961
    %2784 = vmatpush1.bf16.msra.mxu0 %v1960
    %2785 = vmatprep.subr.bf16.mxu0 %v1959
    %2786 = vmatpush1.bf16.msra.mxu0 %v1958
    %2787 = vmatprep.subr.bf16.mxu0 %v1989
    %2788 = vmatpush2.bf16.msra.mxu0 %v1988
    %2789 = vmatprep.subr.bf16.mxu0 %v1987
    %2790 = vmatpush2.bf16.msra.mxu0 %v1986
    %2791 = vmatprep.subr.bf16.mxu0 %v1985
    %2792 = vmatpush2.bf16.msra.mxu0 %v1984
    %2793 = vmatprep.subr.bf16.mxu0 %v1983
    %2794 = vmatpush2.bf16.msra.mxu0 %v1982
    %2795 = vmatprep.subr.bf16.mxu0 %v1981
    %2796 = vmatpush2.bf16.msra.mxu0 %v1980
    %2797 = vmatprep.subr.bf16.mxu0 %v1979
    %2798 = vmatpush2.bf16.msra.mxu0 %v1978
    %2799 = vmatprep.subr.bf16.mxu0 %v1977
    %2800 = vmatpush2.bf16.msra.mxu0 %v1976
    %2801 = vmatprep.subr.bf16.mxu0 %v1975
    %2802 = vmatpush2.bf16.msra.mxu0 %v1974
    %2803 = vmatprep.mubr.bf16.mxu0 %v237
    %2804 = vmatmul.mubr.bf16.gmra.mxu0 %v236
    %v2805 = vpop.f32.mrf.mxu0
    %v2806 = vadd.f32 %v2765, %v2805
    %v2807 = vpop.f32.mrf.mxu0
    %v2808 = vadd.f32 %v2767, %v2807
    %v2809 = vpop.f32.mrf.mxu0
    %v2810 = vpop.f32.mrf.mxu0
    %2811 = vdwg.mxu0
    %2812 = vmatprep.subr.bf16.mxu0 %v2005
    %2813 = vmatpush1.bf16.msra.mxu0 %v2004
    %2814 = vmatprep.subr.bf16.mxu0 %v2003
    %2815 = vmatpush1.bf16.msra.mxu0 %v2002
    %2816 = vmatprep.subr.bf16.mxu0 %v2001
    %2817 = vmatpush1.bf16.msra.mxu0 %v2000
    %2818 = vmatprep.subr.bf16.mxu0 %v1999
    %2819 = vmatpush1.bf16.msra.mxu0 %v1998
    %2820 = vmatprep.subr.bf16.mxu0 %v1997
    %2821 = vmatpush1.bf16.msra.mxu0 %v1996
    %2822 = vmatprep.subr.bf16.mxu0 %v1995
    %2823 = vmatpush1.bf16.msra.mxu0 %v1994
    %2824 = vmatprep.subr.bf16.mxu0 %v1993
    %2825 = vmatpush1.bf16.msra.mxu0 %v1992
    %2826 = vmatprep.subr.bf16.mxu0 %v1991
    %2827 = vmatpush1.bf16.msra.mxu0 %v1990
    %2828 = vmatprep.subr.bf16.mxu0 %v2021
    %2829 = vmatpush2.bf16.msra.mxu0 %v2020
    %2830 = vmatprep.subr.bf16.mxu0 %v2019
    %2831 = vmatpush2.bf16.msra.mxu0 %v2018
    %2832 = vmatprep.subr.bf16.mxu0 %v2017
    %2833 = vmatpush2.bf16.msra.mxu0 %v2016
    %2834 = vmatprep.subr.bf16.mxu0 %v2015
    %2835 = vmatpush2.bf16.msra.mxu0 %v2014
    %2836 = vmatprep.subr.bf16.mxu0 %v2013
    %2837 = vmatpush2.bf16.msra.mxu0 %v2012
    %2838 = vmatprep.subr.bf16.mxu0 %v2011
    %2839 = vmatpush2.bf16.msra.mxu0 %v2010
    %2840 = vmatprep.subr.bf16.mxu0 %v2009
    %2841 = vmatpush2.bf16.msra.mxu0 %v2008
    %2842 = vmatprep.subr.bf16.mxu0 %v2007
    %2843 = vmatpush2.bf16.msra.mxu0 %v2006
    %2844 = vmatprep.mubr.bf16.mxu0 %v239
    %2845 = vmatmul.mubr.bf16.gmra.mxu0 %v238
    %v2846 = vpop.f32.mrf.mxu0
    %v2847 = vadd.f32 %v2806, %v2846
    %v2848 = vpop.f32.mrf.mxu0
    %v2849 = vadd.f32 %v2808, %v2848
    %v2850 = vpop.f32.mrf.mxu0
    %v2851 = vpop.f32.mrf.mxu0
    %2852 = vdwg.mxu0
    %2853 = vmatprep.subr.bf16.mxu0 %v2037
    %2854 = vmatpush1.bf16.msra.mxu0 %v2036
    %2855 = vmatprep.subr.bf16.mxu0 %v2035
    %2856 = vmatpush1.bf16.msra.mxu0 %v2034
    %2857 = vmatprep.subr.bf16.mxu0 %v2033
    %2858 = vmatpush1.bf16.msra.mxu0 %v2032
    %2859 = vmatprep.subr.bf16.mxu0 %v2031
    %2860 = vmatpush1.bf16.msra.mxu0 %v2030
    %2861 = vmatprep.subr.bf16.mxu0 %v2029
    %2862 = vmatpush1.bf16.msra.mxu0 %v2028
    %2863 = vmatprep.subr.bf16.mxu0 %v2027
    %2864 = vmatpush1.bf16.msra.mxu0 %v2026
    %2865 = vmatprep.subr.bf16.mxu0 %v2025
    %2866 = vmatpush1.bf16.msra.mxu0 %v2024
    %2867 = vmatprep.subr.bf16.mxu0 %v2023
    %2868 = vmatpush1.bf16.msra.mxu0 %v2022
    %2869 = vmatprep.subr.bf16.mxu0 %v2053
    %2870 = vmatpush2.bf16.msra.mxu0 %v2052
    %2871 = vmatprep.subr.bf16.mxu0 %v2051
    %2872 = vmatpush2.bf16.msra.mxu0 %v2050
    %2873 = vmatprep.subr.bf16.mxu0 %v2049
    %2874 = vmatpush2.bf16.msra.mxu0 %v2048
    %2875 = vmatprep.subr.bf16.mxu0 %v2047
    %2876 = vmatpush2.bf16.msra.mxu0 %v2046
    %2877 = vmatprep.subr.bf16.mxu0 %v2045
    %2878 = vmatpush2.bf16.msra.mxu0 %v2044
    %2879 = vmatprep.subr.bf16.mxu0 %v2043
    %2880 = vmatpush2.bf16.msra.mxu0 %v2042
    %2881 = vmatprep.subr.bf16.mxu0 %v2041
    %2882 = vmatpush2.bf16.msra.mxu0 %v2040
    %2883 = vmatprep.subr.bf16.mxu0 %v2039
    %2884 = vmatpush2.bf16.msra.mxu0 %v2038
    %2885 = vmatprep.mubr.bf16.mxu0 %v241
    %2886 = vmatmul.mubr.bf16.gmra.mxu0 %v240
    %v2887 = vpop.f32.mrf.mxu0
    %v2888 = vadd.f32 %v2847, %v2887
    %v2889 = vpop.f32.mrf.mxu0
    %v2890 = vadd.f32 %v2849, %v2889
    %v2891 = vpop.f32.mrf.mxu0
    %v2892 = vpop.f32.mrf.mxu0
    %2893 = vdwg.mxu0
    %2894 = vmatprep.subr.bf16.mxu0 %v2069
    %2895 = vmatpush1.bf16.msra.mxu0 %v2068
    %2896 = vmatprep.subr.bf16.mxu0 %v2067
    %2897 = vmatpush1.bf16.msra.mxu0 %v2066
    %2898 = vmatprep.subr.bf16.mxu0 %v2065
    %2899 = vmatpush1.bf16.msra.mxu0 %v2064
    %2900 = vmatprep.subr.bf16.mxu0 %v2063
    %2901 = vmatpush1.bf16.msra.mxu0 %v2062
    %2902 = vmatprep.subr.bf16.mxu0 %v2061
    %2903 = vmatpush1.bf16.msra.mxu0 %v2060
    %2904 = vmatprep.subr.bf16.mxu0 %v2059
    %2905 = vmatpush1.bf16.msra.mxu0 %v2058
    %2906 = vmatprep.subr.bf16.mxu0 %v2057
    %2907 = vmatpush1.bf16.msra.mxu0 %v2056
    %2908 = vmatprep.subr.bf16.mxu0 %v2055
    %2909 = vmatpush1.bf16.msra.mxu0 %v2054
    %2910 = vmatprep.subr.bf16.mxu0 %v2085
    %2911 = vmatpush2.bf16.msra.mxu0 %v2084
    %2912 = vmatprep.subr.bf16.mxu0 %v2083
    %2913 = vmatpush2.bf16.msra.mxu0 %v2082
    %2914 = vmatprep.subr.bf16.mxu0 %v2081
    %2915 = vmatpush2.bf16.msra.mxu0 %v2080
    %2916 = vmatprep.subr.bf16.mxu0 %v2079
    %2917 = vmatpush2.bf16.msra.mxu0 %v2078
    %2918 = vmatprep.subr.bf16.mxu0 %v2077
    %2919 = vmatpush2.bf16.msra.mxu0 %v2076
    %2920 = vmatprep.subr.bf16.mxu0 %v2075
    %2921 = vmatpush2.bf16.msra.mxu0 %v2074
    %2922 = vmatprep.subr.bf16.mxu0 %v2073
    %2923 = vmatpush2.bf16.msra.mxu0 %v2072
    %2924 = vmatprep.subr.bf16.mxu0 %v2071
    %2925 = vmatpush2.bf16.msra.mxu0 %v2070
    %2926 = vmatprep.mubr.bf16.mxu0 %v243
    %2927 = vmatmul.mubr.bf16.gmra.mxu0 %v242
    %v2928 = vpop.f32.mrf.mxu0
    %v2929 = vadd.f32 %v2888, %v2928
    %v2930 = vpop.f32.mrf.mxu0
    %v2931 = vadd.f32 %v2890, %v2930
    %v2932 = vpop.f32.mrf.mxu0
    %v2933 = vpop.f32.mrf.mxu0
    %2934 = vdwg.mxu0
    %2935 = vmatprep.subr.bf16.mxu0 %v2101
    %2936 = vmatpush1.bf16.msra.mxu0 %v2100
    %2937 = vmatprep.subr.bf16.mxu0 %v2099
    %2938 = vmatpush1.bf16.msra.mxu0 %v2098
    %2939 = vmatprep.subr.bf16.mxu0 %v2097
    %2940 = vmatpush1.bf16.msra.mxu0 %v2096
    %2941 = vmatprep.subr.bf16.mxu0 %v2095
    %2942 = vmatpush1.bf16.msra.mxu0 %v2094
    %2943 = vmatprep.subr.bf16.mxu0 %v2093
    %2944 = vmatpush1.bf16.msra.mxu0 %v2092
    %2945 = vmatprep.subr.bf16.mxu0 %v2091
    %2946 = vmatpush1.bf16.msra.mxu0 %v2090
    %2947 = vmatprep.subr.bf16.mxu0 %v2089
    %2948 = vmatpush1.bf16.msra.mxu0 %v2088
    %2949 = vmatprep.subr.bf16.mxu0 %v2087
    %2950 = vmatpush1.bf16.msra.mxu0 %v2086
    %2951 = vmatprep.subr.bf16.mxu0 %v2117
    %2952 = vmatpush2.bf16.msra.mxu0 %v2116
    %2953 = vmatprep.subr.bf16.mxu0 %v2115
    %2954 = vmatpush2.bf16.msra.mxu0 %v2114
    %2955 = vmatprep.subr.bf16.mxu0 %v2113
    %2956 = vmatpush2.bf16.msra.mxu0 %v2112
    %2957 = vmatprep.subr.bf16.mxu0 %v2111
    %2958 = vmatpush2.bf16.msra.mxu0 %v2110
    %2959 = vmatprep.subr.bf16.mxu0 %v2109
    %2960 = vmatpush2.bf16.msra.mxu0 %v2108
    %2961 = vmatprep.subr.bf16.mxu0 %v2107
    %2962 = vmatpush2.bf16.msra.mxu0 %v2106
    %2963 = vmatprep.subr.bf16.mxu0 %v2105
    %2964 = vmatpush2.bf16.msra.mxu0 %v2104
    %2965 = vmatprep.subr.bf16.mxu0 %v2103
    %2966 = vmatpush2.bf16.msra.mxu0 %v2102
    %2967 = vmatprep.mubr.bf16.mxu0 %v245
    %2968 = vmatmul.mubr.bf16.gmra.mxu0 %v244
    %v2969 = vpop.f32.mrf.mxu0
    %v2970 = vadd.f32 %v2929, %v2969
    %v2971 = vpop.f32.mrf.mxu0
    %v2972 = vadd.f32 %v2931, %v2971
    %v2973 = vpop.f32.mrf.mxu0
    %v2974 = vpop.f32.mrf.mxu0
    %2975 = vdwg.mxu0
    %2976 = vmatprep.subr.bf16.mxu0 %v2133
    %2977 = vmatpush1.bf16.msra.mxu0 %v2132
    %2978 = vmatprep.subr.bf16.mxu0 %v2131
    %2979 = vmatpush1.bf16.msra.mxu0 %v2130
    %2980 = vmatprep.subr.bf16.mxu0 %v2129
    %2981 = vmatpush1.bf16.msra.mxu0 %v2128
    %2982 = vmatprep.subr.bf16.mxu0 %v2127
    %2983 = vmatpush1.bf16.msra.mxu0 %v2126
    %2984 = vmatprep.subr.bf16.mxu0 %v2125
    %2985 = vmatpush1.bf16.msra.mxu0 %v2124
    %2986 = vmatprep.subr.bf16.mxu0 %v2123
    %2987 = vmatpush1.bf16.msra.mxu0 %v2122
    %2988 = vmatprep.subr.bf16.mxu0 %v2121
    %2989 = vmatpush1.bf16.msra.mxu0 %v2120
    %2990 = vmatprep.subr.bf16.mxu0 %v2119
    %2991 = vmatpush1.bf16.msra.mxu0 %v2118
    %2992 = vmatprep.subr.bf16.mxu0 %v2149
    %2993 = vmatpush2.bf16.msra.mxu0 %v2148
    %2994 = vmatprep.subr.bf16.mxu0 %v2147
    %2995 = vmatpush2.bf16.msra.mxu0 %v2146
    %2996 = vmatprep.subr.bf16.mxu0 %v2145
    %2997 = vmatpush2.bf16.msra.mxu0 %v2144
    %2998 = vmatprep.subr.bf16.mxu0 %v2143
    %2999 = vmatpush2.bf16.msra.mxu0 %v2142
    %3000 = vmatprep.subr.bf16.mxu0 %v2141
    %3001 = vmatpush2.bf16.msra.mxu0 %v2140
    %3002 = vmatprep.subr.bf16.mxu0 %v2139
    %3003 = vmatpush2.bf16.msra.mxu0 %v2138
    %3004 = vmatprep.subr.bf16.mxu0 %v2137
    %3005 = vmatpush2.bf16.msra.mxu0 %v2136
    %3006 = vmatprep.subr.bf16.mxu0 %v2135
    %3007 = vmatpush2.bf16.msra.mxu0 %v2134
    %3008 = vmatprep.mubr.bf16.mxu0 %v247
    %3009 = vmatmul.mubr.bf16.gmra.mxu0 %v246
    %v3010 = vpop.f32.mrf.mxu0
    %v3011 = vadd.f32 %v2970, %v3010
    %v3012 = vpop.f32.mrf.mxu0
    %v3013 = vadd.f32 %v2972, %v3012
    %v3014 = vpop.f32.mrf.mxu0
    %v3015 = vpop.f32.mrf.mxu0
    %3016 = vdwg.mxu0
    %3017 = vmatprep.subr.bf16.mxu0 %v2165
    %3018 = vmatpush1.bf16.msra.mxu0 %v2164
    %3019 = vmatprep.subr.bf16.mxu0 %v2163
    %3020 = vmatpush1.bf16.msra.mxu0 %v2162
    %3021 = vmatprep.subr.bf16.mxu0 %v2161
    %3022 = vmatpush1.bf16.msra.mxu0 %v2160
    %3023 = vmatprep.subr.bf16.mxu0 %v2159
    %3024 = vmatpush1.bf16.msra.mxu0 %v2158
    %3025 = vmatprep.subr.bf16.mxu0 %v2157
    %3026 = vmatpush1.bf16.msra.mxu0 %v2156
    %3027 = vmatprep.subr.bf16.mxu0 %v2155
    %3028 = vmatpush1.bf16.msra.mxu0 %v2154
    %3029 = vmatprep.subr.bf16.mxu0 %v2153
    %3030 = vmatpush1.bf16.msra.mxu0 %v2152
    %3031 = vmatprep.subr.bf16.mxu0 %v2151
    %3032 = vmatpush1.bf16.msra.mxu0 %v2150
    %3033 = vmatprep.subr.bf16.mxu0 %v2181
    %3034 = vmatpush2.bf16.msra.mxu0 %v2180
    %3035 = vmatprep.subr.bf16.mxu0 %v2179
    %3036 = vmatpush2.bf16.msra.mxu0 %v2178
    %3037 = vmatprep.subr.bf16.mxu0 %v2177
    %3038 = vmatpush2.bf16.msra.mxu0 %v2176
    %3039 = vmatprep.subr.bf16.mxu0 %v2175
    %3040 = vmatpush2.bf16.msra.mxu0 %v2174
    %3041 = vmatprep.subr.bf16.mxu0 %v2173
    %3042 = vmatpush2.bf16.msra.mxu0 %v2172
    %3043 = vmatprep.subr.bf16.mxu0 %v2171
    %3044 = vmatpush2.bf16.msra.mxu0 %v2170
    %3045 = vmatprep.subr.bf16.mxu0 %v2169
    %3046 = vmatpush2.bf16.msra.mxu0 %v2168
    %3047 = vmatprep.subr.bf16.mxu0 %v2167
    %3048 = vmatpush2.bf16.msra.mxu0 %v2166
    %3049 = vmatprep.mubr.bf16.mxu0 %v249
    %3050 = vmatmul.mubr.bf16.gmra.mxu0 %v248
    %v3051 = vpop.f32.mrf.mxu0
    %v3052 = vadd.f32 %v3011, %v3051
    %v3053 = vpop.f32.mrf.mxu0
    %v3054 = vadd.f32 %v3013, %v3053
    %v3055 = vpop.f32.mrf.mxu0
    %v3056 = vpop.f32.mrf.mxu0
    %3057 = vdwg.mxu0
    %v3058 = vmax.f32 %v3052, 0.0
    %v3059 = vmax.f32 %v3054, 0.0
    %v3060 = vpack.c.bf16 %v3058, %v3058
    %v3061 = vpack.c.bf16 %v3059, %v3059
    %v3062 = vld [vmem:[#allocation10] sm:$0xf]
    %v3063 = vld [vmem:[#allocation10 + $0x4] sm:$0xf]
    %v3064 = vld [vmem:[#allocation10 + $0x8] sm:$0xf]
    %v3065 = vld [vmem:[#allocation10 + $0xc] sm:$0xf]
    %v3066 = vld [vmem:[#allocation10 + $0x10] sm:$0xf]
    %v3067 = vld [vmem:[#allocation10 + $0x14] sm:$0xf]
    %v3068 = vld [vmem:[#allocation10 + $0x18] sm:$0xf]
    %v3069 = vld [vmem:[#allocation10 + $0x1c] sm:$0xf]
    %v3070 = vld [vmem:[#allocation10 + $0x20] sm:$0xf]
    %v3071 = vld [vmem:[#allocation10 + $0x24] sm:$0xf]
    %v3072 = vld [vmem:[#allocation10 + $0x28] sm:$0xf]
    %v3073 = vld [vmem:[#allocation10 + $0x2c] sm:$0xf]
    %v3074 = vld [vmem:[#allocation10 + $0x30] sm:$0xf]
    %v3075 = vld [vmem:[#allocation10 + $0x34] sm:$0xf]
    %v3076 = vld [vmem:[#allocation10 + $0x38] sm:$0xf]
    %v3077 = vld [vmem:[#allocation10 + $0x3c] sm:$0xf]
    %v3078 = vld [vmem:[#allocation10 + $0x40] sm:$0xf]
    %v3079 = vld [vmem:[#allocation10 + $0x44] sm:$0xf]
    %v3080 = vld [vmem:[#allocation10 + $0x48] sm:$0xf]
    %v3081 = vld [vmem:[#allocation10 + $0x4c] sm:$0xf]
    %v3082 = vld [vmem:[#allocation10 + $0x50] sm:$0xf]
    %v3083 = vld [vmem:[#allocation10 + $0x54] sm:$0xf]
    %v3084 = vld [vmem:[#allocation10 + $0x58] sm:$0xf]
    %v3085 = vld [vmem:[#allocation10 + $0x5c] sm:$0xf]
    %v3086 = vld [vmem:[#allocation10 + $0x60] sm:$0xf]
    %v3087 = vld [vmem:[#allocation10 + $0x64] sm:$0xf]
    %v3088 = vld [vmem:[#allocation10 + $0x68] sm:$0xf]
    %v3089 = vld [vmem:[#allocation10 + $0x6c] sm:$0xf]
    %v3090 = vld [vmem:[#allocation10 + $0x70] sm:$0xf]
    %v3091 = vld [vmem:[#allocation10 + $0x74] sm:$0xf]
    %v3092 = vld [vmem:[#allocation10 + $0x78] sm:$0xf]
    %v3093 = vld [vmem:[#allocation10 + $0x7c] sm:$0xf]
    %v3094 = vld [vmem:[#allocation11] sm:$0x1]
    %v3096 = vlaneseq
    %v3097 = vshrl.u32 %v3096, 7
    %v3098 = vsub.s32 0, %v3097
    %v3099 = vrot.slane %v3094, %v3098
    %v3133 = vunpack.c.l.b16 %v3062
    %v3134 = vunpack.c.l.b16 %v3063
    %v3135 = vunpack.c.l.b16 %v3064
    %v3136 = vunpack.c.l.b16 %v3065
    %v3137 = vunpack.c.l.b16 %v3066
    %v3138 = vunpack.c.l.b16 %v3067
    %v3139 = vunpack.c.l.b16 %v3068
    %v3140 = vunpack.c.l.b16 %v3069
    %v3141 = vunpack.c.l.b16 %v3070
    %v3142 = vunpack.c.l.b16 %v3071
    %v3143 = vunpack.c.l.b16 %v3072
    %v3144 = vunpack.c.l.b16 %v3073
    %v3145 = vunpack.c.l.b16 %v3074
    %v3146 = vunpack.c.l.b16 %v3075
    %v3147 = vunpack.c.l.b16 %v3076
    %v3148 = vunpack.c.l.b16 %v3077
    %v3149 = vunpack.c.l.b16 %v3078
    %v3150 = vunpack.c.l.b16 %v3079
    %v3151 = vunpack.c.l.b16 %v3080
    %v3152 = vunpack.c.l.b16 %v3081
    %v3153 = vunpack.c.l.b16 %v3082
    %v3154 = vunpack.c.l.b16 %v3083
    %v3155 = vunpack.c.l.b16 %v3084
    %v3156 = vunpack.c.l.b16 %v3085
    %v3157 = vunpack.c.l.b16 %v3086
    %v3158 = vunpack.c.l.b16 %v3087
    %v3159 = vunpack.c.l.b16 %v3088
    %v3160 = vunpack.c.l.b16 %v3089
    %v3161 = vunpack.c.l.b16 %v3090
    %v3162 = vunpack.c.l.b16 %v3091
    %v3163 = vunpack.c.l.b16 %v3092
    %v3164 = vunpack.c.l.b16 %v3093
    %v3165 = vpack.c.b16 %v3134, %v3133
    %v3166 = vpack.c.b16 %v3136, %v3135
    %v3167 = vpack.c.b16 %v3138, %v3137
    %v3168 = vpack.c.b16 %v3140, %v3139
    %v3169 = vpack.c.b16 %v3142, %v3141
    %v3170 = vpack.c.b16 %v3144, %v3143
    %v3171 = vpack.c.b16 %v3146, %v3145
    %v3172 = vpack.c.b16 %v3148, %v3147
    %v3173 = vpack.c.b16 %v3150, %v3149
    %v3174 = vpack.c.b16 %v3152, %v3151
    %v3175 = vpack.c.b16 %v3154, %v3153
    %v3176 = vpack.c.b16 %v3156, %v3155
    %v3177 = vpack.c.b16 %v3158, %v3157
    %v3178 = vpack.c.b16 %v3160, %v3159
    %v3179 = vpack.c.b16 %v3162, %v3161
    %v3180 = vpack.c.b16 %v3164, %v3163
    %3197 = vmatprep.subr.bf16.mxu0 0
    %3198 = vmatpush1.bf16.msra.mxu0 %v3172
    %3199 = vmatprep.subr.bf16.mxu0 0
    %3200 = vmatpush1.bf16.msra.mxu0 %v3171
    %3201 = vmatprep.subr.bf16.mxu0 0
    %3202 = vmatpush1.bf16.msra.mxu0 %v3170
    %3203 = vmatprep.subr.bf16.mxu0 0
    %3204 = vmatpush1.bf16.msra.mxu0 %v3169
    %3205 = vmatprep.subr.bf16.mxu0 0
    %3206 = vmatpush1.bf16.msra.mxu0 %v3168
    %3207 = vmatprep.subr.bf16.mxu0 0
    %3208 = vmatpush1.bf16.msra.mxu0 %v3167
    %3209 = vmatprep.subr.bf16.mxu0 0
    %3210 = vmatpush1.bf16.msra.mxu0 %v3166
    %3211 = vmatprep.subr.bf16.mxu0 0
    %3212 = vmatpush1.bf16.msra.mxu0 %v3165
    %3213 = vmatprep.subr.bf16.mxu0 0
    %3214 = vmatpush2.bf16.msra.mxu0 %v3180
    %3215 = vmatprep.subr.bf16.mxu0 0
    %3216 = vmatpush2.bf16.msra.mxu0 %v3179
    %3217 = vmatprep.subr.bf16.mxu0 0
    %3218 = vmatpush2.bf16.msra.mxu0 %v3178
    %3219 = vmatprep.subr.bf16.mxu0 0
    %3220 = vmatpush2.bf16.msra.mxu0 %v3177
    %3221 = vmatprep.subr.bf16.mxu0 0
    %3222 = vmatpush2.bf16.msra.mxu0 %v3176
    %3223 = vmatprep.subr.bf16.mxu0 0
    %3224 = vmatpush2.bf16.msra.mxu0 %v3175
    %3225 = vmatprep.subr.bf16.mxu0 0
    %3226 = vmatpush2.bf16.msra.mxu0 %v3174
    %3227 = vmatprep.subr.bf16.mxu0 0
    %3228 = vmatpush2.bf16.msra.mxu0 %v3173
    %3229 = vmatprep.mubr.bf16.mxu0 %v3061
    %3230 = vmatmul.mubr.bf16.gmra.mxu0 %v3060
    %v3231 = vpop.f32.mrf.mxu0
    %v3232 = vadd.f32 %v3099, %v3231
    %v3233 = vpop.f32.mrf.mxu0
    %v3234 = vpop.f32.mrf.mxu0
    %v3235 = vpop.f32.mrf.mxu0
    %3236 = vdwg.mxu0
    %v3237 = vmax.f32 %v3232, 0.0
    %v3238 = vpack.c.bf16 %v3237, %v3237
    %v3239 = vld [vmem:[#allocation13] sm:$0xf]
    %v3240 = vld [vmem:[#allocation13 + $0x4] sm:$0xf]
    %v3241 = vld [vmem:[#allocation13 + $0x8] sm:$0xf]
    %v3242 = vld [vmem:[#allocation13 + $0xc] sm:$0xf]
    %v3243 = vld [vmem:[#allocation13 + $0x10] sm:$0xf]
    %v3244 = vld [vmem:[#allocation13 + $0x14] sm:$0xf]
    %v3245 = vld [vmem:[#allocation13 + $0x18] sm:$0xf]
    %v3246 = vld [vmem:[#allocation13 + $0x1c] sm:$0xf]
    %v3247 = vld [vmem:[#allocation13 + $0x20] sm:$0xf]
    %v3248 = vld [vmem:[#allocation13 + $0x24] sm:$0xf]
    %v3249 = vld [vmem:[#allocation13 + $0x28] sm:$0xf]
    %v3250 = vld [vmem:[#allocation13 + $0x2c] sm:$0xf]
    %v3251 = vld [vmem:[#allocation13 + $0x30] sm:$0xf]
    %v3252 = vld [vmem:[#allocation13 + $0x34] sm:$0xf]
    %v3253 = vld [vmem:[#allocation13 + $0x38] sm:$0xf]
    %v3254 = vld [vmem:[#allocation13 + $0x3c] sm:$0xf]
    %v3255 = vld [vmem:[#allocation14] sm:$0x1]
    %v3257 = vlaneseq
    %v3258 = vshrl.u32 %v3257, 7
    %v3259 = vsub.s32 0, %v3258
    %v3260 = vrot.slane %v3255, %v3259
    %v3278 = vunpack.c.l.b16 %v3239
    %v3279 = vunpack.c.l.b16 %v3240
    %v3280 = vunpack.c.l.b16 %v3241
    %v3281 = vunpack.c.l.b16 %v3242
    %v3282 = vunpack.c.l.b16 %v3243
    %v3283 = vunpack.c.l.b16 %v3244
    %v3284 = vunpack.c.l.b16 %v3245
    %v3285 = vunpack.c.l.b16 %v3246
    %v3286 = vunpack.c.l.b16 %v3247
    %v3287 = vunpack.c.l.b16 %v3248
    %v3288 = vunpack.c.l.b16 %v3249
    %v3289 = vunpack.c.l.b16 %v3250
    %v3290 = vunpack.c.l.b16 %v3251
    %v3291 = vunpack.c.l.b16 %v3252
    %v3292 = vunpack.c.l.b16 %v3253
    %v3293 = vunpack.c.l.b16 %v3254
    %v3294 = vpack.c.b16 %v3279, %v3278
    %v3295 = vpack.c.b16 %v3281, %v3280
    %v3296 = vpack.c.b16 %v3283, %v3282
    %v3297 = vpack.c.b16 %v3285, %v3284
    %v3298 = vpack.c.b16 %v3287, %v3286
    %v3299 = vpack.c.b16 %v3289, %v3288
    %v3300 = vpack.c.b16 %v3291, %v3290
    %v3301 = vpack.c.b16 %v3293, %v3292
    %3310 = vmatprep.subr.bf16.mxu0 0
    %3311 = vmatpush1.bf16.msra.mxu0 %v3301
    %3312 = vmatprep.subr.bf16.mxu0 0
    %3313 = vmatpush1.bf16.msra.mxu0 %v3300
    %3314 = vmatprep.subr.bf16.mxu0 0
    %3315 = vmatpush1.bf16.msra.mxu0 %v3299
    %3316 = vmatprep.subr.bf16.mxu0 0
    %3317 = vmatpush1.bf16.msra.mxu0 %v3298
    %3318 = vmatprep.subr.bf16.mxu0 0
    %3319 = vmatpush1.bf16.msra.mxu0 %v3297
    %3320 = vmatprep.subr.bf16.mxu0 0
    %3321 = vmatpush1.bf16.msra.mxu0 %v3296
    %3322 = vmatprep.subr.bf16.mxu0 0
    %3323 = vmatpush1.bf16.msra.mxu0 %v3295
    %3324 = vmatprep.subr.bf16.mxu0 0
    %3325 = vmatpush1.bf16.msra.mxu0 %v3294
    %3326 = vmatprep.subr.bf16.mxu0 0
    %3327 = vmatpush2.bf16.msra.mxu0 0
    %3328 = vmatprep.subr.bf16.mxu0 0
    %3329 = vmatpush2.bf16.msra.mxu0 0
    %3330 = vmatprep.subr.bf16.mxu0 0
    %3331 = vmatpush2.bf16.msra.mxu0 0
    %3332 = vmatprep.subr.bf16.mxu0 0
    %3333 = vmatpush2.bf16.msra.mxu0 0
    %3334 = vmatprep.subr.bf16.mxu0 0
    %3335 = vmatpush2.bf16.msra.mxu0 0
    %3336 = vmatprep.subr.bf16.mxu0 0
    %3337 = vmatpush2.bf16.msra.mxu0 0
    %3338 = vmatprep.subr.bf16.mxu0 0
    %3339 = vmatpush2.bf16.msra.mxu0 0
    %3340 = vmatprep.subr.bf16.mxu0 0
    %3341 = vmatpush2.bf16.msra.mxu0 0
    %3342 = vmatprep.mubr.bf16.mxu0 0
    %3343 = vmatmul.mubr.bf16.gmra.mxu0 %v3238
    %v3344 = vpop.f32.mrf.mxu0
    %v3345 = vadd.f32 %v3260, %v3344
    %v3346 = vpop.f32.mrf.mxu0
    %v3347 = vpop.f32.mrf.mxu0
    %v3348 = vpop.f32.mrf.mxu0
    %3349 = vdwg.mxu0
    %v3350 = vlaneseq
    %v3351 = vand.u32 %v3350, 127
    %vm3352 = vcmp.lt.s32.totalorder %v3351, 64
    %v3353 = vmul.f32 %v3345, 1.442695
    %v3354 = vpow.pop %v3353
    %v3355 = vsel %vm3352, %v3345, %v3354
    %3356 = vst [vmem:[#allocation16] sm:$0xff] %v3355
    // Predicated region
    $region66: #{tpu_custom_call.1} parent=1 // pred_check
      _
    $region67: #{tpu_custom_call.1} parent=1 // pred_check_branch
      %3358 = sbr.rel (0) target = $region69
    $region68: #{tpu_custom_call.1} parent=1 // pred_region
      %s3360 = ssub.s32 128, 128
      %3361 = vsyncadd [#allocation4], %s3360
      %s3363 = sshll.u32 [#allocation16], 4
      %s3364 = int_to_ptr.vmem [resolvable:$true] %s3363
      %3366 = dma.vmem_to_hbm [thread:$0]  %s3364, 128, %s8, [#allocation4]
    $region69: #{tpu_custom_call.1} parent=1 // pred_fallthru
      _
    // Predicated region
    $region70: #{tpu_custom_call.1} parent=1 // pred_check
      _
    $region71: #{tpu_custom_call.1} parent=1 // pred_check_branch
      %3368 = sbr.rel (0) target = $region73
    $region72: #{tpu_custom_call.1} parent=1 // pred_region
      %3369 = dma.done [#allocation4], 128
    $region73: #{tpu_custom_call.1} parent=1 // pred_fallthru
      _
    %3370 = vsyncpa [#allocation3], 1
    %3371 = vsyncpa [#allocation6], 1
    %3372 = vsyncpa [#allocation9], 1
    %3373 = vsyncpa [#allocation12], 1
    %3374 = vsyncpa [#allocation15], 1
    %3375 = vsyncpa [#allocation4], 1

</llo_original>
